<compile_context>
chip_gen: v7x
topology: tpu7x:2x2x1
jax: 0.10.0
libtpu: 0.0.40
codegen_flags: <defaults>
</compile_context>

<pallas_src>
import jax
import jax.numpy as jnp
from jax.experimental import pallas as pl
from jax.experimental.pallas import tpu as pltpu


# --------------------------------------------------------------------------------------
# Kernels
# --------------------------------------------------------------------------------------
def conv_down_kernel(ph_ref, w_ref, b_ref, out_ref):
    """3x3 / stride-2 / pad-1 conv for `nb` samples.

    ph_ref  : (nb, 4, Hp, Wp, Cin) bf16   space-to-depth phases of the padded input,
                                          phase p = 2*row_parity + col_parity
    w_ref   : (9*Cin, Cout) bf16          HWIO weights, row = (dy*3+dx)*Cin + ci
    b_ref   : (1, Cout) f32
    out_ref : (nb, Ho*Wo, Cout) f32       lane-dense output (Cout on lanes)
    """
    nb, _, Hp, Wp, Cin = ph_ref.shape
    Ho, Wo = Hp - 1, Wp - 1
    Cout = out_ref.shape[-1]
    M = nb * Ho * Wo

    acc = jnp.zeros((M, Cout), jnp.float32)
    for dy in range(3):
        ra = dy // 2
        for dx in range(3):
            ca = dx // 2
            p = (dy % 2) * 2 + (dx % 2)
            k = dy * 3 + dx
            # Contiguous window of one phase: no strided loads, no scratch stores.
            win = ph_ref[:, p, ra:ra + Ho, ca:ca + Wo, :]          # (nb, Ho, Wo, Cin)
            win = win.reshape(M, Cin)                              # free when Wo % 8 == 0
            acc = acc + jnp.dot(win, w_ref[k * Cin:(k + 1) * Cin, :],
                                preferred_element_type=jnp.float32)
    out_ref[...] = (acc + b_ref[...]).reshape(nb, Ho * Wo, Cout)


def avgpool_down_kernel(x_ref, out_ref):
    """2x2 / stride-2 average pool for one sample (raw NHWC block).

    x_ref   : (1, H, W, C) f32
    out_ref : (1, Ho, Wo, C) f32
    """
    nb, H, W, C = x_ref.shape
    Ho, Wo = H // 2, W // 2
    # Column (W) parity: two sublane-strided loads (even / odd columns).
    xe = x_ref[:, :, pl.ds(0, Wo, 2), :]                           # (nb, H, Wo, C)
    xo = x_ref[:, :, pl.ds(1, Wo, 2), :]
    xw = xe + xo
    # Row (H) parity: free reshape on an outer (non-tiled) dim, then add the two rows.
    xw = xw.reshape(nb, Ho, 2, Wo, C)
    out_ref[...] = (xw[:, :, 0] + xw[:, :, 1]) * 0.25


# --------------------------------------------------------------------------------------
# Wrappers (layout plumbing only: NCHW<->NHWC, pad, phase split, weight reshape)
# --------------------------------------------------------------------------------------
def _phase_split_padded_bf16(x_nhwc):
    """pad-1 + space-to-depth: (N,H,W,C) -> (N, 4, H/2+1, W/2+1, C) bf16.

    Single fused XLA producer (pad + strided slices + stack + cast);
    phase index p = 2*row_parity + col_parity.
    """
    x = jnp.pad(x_nhwc, ((0, 0), (1, 1), (1, 1), (0, 0))).astype(jnp.bfloat16)
    return jnp.stack([x[:, a::2, b::2, :] for a in (0, 1) for b in (0, 1)], axis=1)


def _pick_batch_block(N, Ho, Wo, Cin, Cout, vmem_budget=24 << 20):
    """Samples per grid step: fill MXU rows (M = nb*Ho*Wo >= 256) while fitting the
    per-step working set in VMEM and keeping >= 2 grid steps (v7x has 2 TCs)."""
    hw = Ho * Wo
    Hp, Wp = Ho + 1, Wo + 1

    def working_set(nb):
        phases = nb * 4 * Hp * Wp * Cin * 2          # bf16 input block (double buffered)
        out = nb * hw * Cout * 4                     # f32 output block (double buffered)
        weights = 9 * Cin * Cout * 2 + Cout * 4
        acc = nb * hw * Cout * 4                     # live f32 accumulator
        return 2 * phases + 2 * out + weights + acc

    divisors = [d for d in range(1, N + 1) if N % d == 0]
    nb = 1
    for d in divisors:
        if working_set(d) > vmem_budget:
            break
        nb = d
        if d * hw >= 256:
            break
    while nb > 1 and N // nb < 2:
        nb = max(d for d in divisors if d < nb)
    return nb, working_set(nb)


def downsample_conv_forward(x_nchw, w_oihw, bias):
    """use_conv=True path: Conv2d(channels, out_channels, 3, stride=2, padding=1)."""
    N, Cin, H, W = x_nchw.shape
    Cout = w_oihw.shape[0]
    assert H % 2 == 0 and W % 2 == 0, "even spatial dims expected"
    Ho, Wo = H // 2, W // 2
    Hp, Wp = Ho + 1, Wo + 1

    # NCHW -> NHWC + pad + phase split + bf16 cast: one producer pass over x.
    # TODO(synk): in a fused UNet keep NHWC end-to-end and drop the transposes.
    x = jnp.transpose(x_nchw, (0, 2, 3, 1))
    phases = _phase_split_padded_bf16(x)                           # (N, 4, Hp, Wp, Cin)
    # (Cout,Cin,3,3) -> HWIO -> (9*Cin, Cout) bf16 MXU operand.
    w_flat = jnp.transpose(w_oihw, (2, 3, 1, 0)).reshape(9 * Cin, Cout).astype(jnp.bfloat16)
    b2 = bias.reshape(1, Cout).astype(jnp.float32)

    nb, ws = _pick_batch_block(N, Ho, Wo, Cin, Cout)
    vmem_limit = int(min(56 << 20, max(32 << 20, ws + (8 << 20))))
    # TODO(synk): add a 'parallel' Ho-tile grid axis for large resolutions (VMEM) or N==1 on v7x.

    out = pl.pallas_call(
        conv_down_kernel,
        out_shape=jax.ShapeDtypeStruct((N, Ho * Wo, Cout), jnp.float32),
        grid_spec=pltpu.PrefetchScalarGridSpec(
            num_scalar_prefetch=0,
            grid=(N // nb,),
            in_specs=[
                pl.BlockSpec((nb, 4, Hp, Wp, Cin), lambda n: (n, 0, 0, 0, 0)),
                pl.BlockSpec((9 * Cin, Cout), lambda n: (0, 0)),
                pl.BlockSpec((1, Cout), lambda n: (0, 0)),
            ],
            out_specs=pl.BlockSpec((nb, Ho * Wo, Cout), lambda n: (n, 0, 0)),
        ),
        compiler_params=pltpu.CompilerParams(
            dimension_semantics=("parallel",),
            vmem_limit_bytes=vmem_limit),
    )(phases, w_flat, b2)

    out = out.reshape(N, Ho, Wo, Cout)
    return jnp.transpose(out, (0, 3, 1, 2))                        # NHWC -> NCHW


def downsample_avgpool_forward(x_nchw):
    """use_conv=False path: AvgPool2d(kernel_size=2, stride=2) (channels == out_channels)."""
    N, C, H, W = x_nchw.shape
    assert H % 2 == 0 and W % 2 == 0, "even spatial dims expected"
    Ho, Wo = H // 2, W // 2

    x = jnp.transpose(x_nchw, (0, 2, 3, 1)).astype(jnp.float32)    # NCHW -> NHWC only
    out = pl.pallas_call(
        avgpool_down_kernel,
        out_shape=jax.ShapeDtypeStruct((N, Ho, Wo, C), jnp.float32),
        grid_spec=pltpu.PrefetchScalarGridSpec(
            num_scalar_prefetch=0,
            grid=(N,),
            in_specs=[pl.BlockSpec((1, H, W, C), lambda n: (n, 0, 0, 0))],
            out_specs=pl.BlockSpec((1, Ho, Wo, C), lambda n: (n, 0, 0, 0)),
        ),
        compiler_params=pltpu.CompilerParams(dimension_semantics=("parallel",)),
    )(x)
    return jnp.transpose(out, (0, 3, 1, 2))


def downsample_forward(x_nchw, use_conv, w_oihw=None, bias=None):
    """Matches Downsample.forward for dims=2."""
    if use_conv:
        return downsample_conv_forward(x_nchw, w_oihw, bias)
    return downsample_avgpool_forward(x_nchw)


# --------------------------------------------------------------------------------------
# Pure-JAX references
# --------------------------------------------------------------------------------------
def conv_down_ref(x_nchw, w_oihw, bias):
    x = jnp.transpose(x_nchw, (0, 2, 3, 1))
    w = jnp.transpose(w_oihw, (2, 3, 1, 0))                        # HWIO
    y = jax.lax.conv_general_dilated(
        x, w, window_strides=(2, 2), padding=((1, 1), (1, 1)),
        dimension_numbers=("NHWC", "HWIO", "NHWC"),
        precision=jax.lax.Precision.HIGHEST)
    y = y + bias.reshape(1, 1, 1, -1)
    return jnp.transpose(y, (0, 3, 1, 2))


def avgpool_down_ref(x_nchw):
    N, C, H, W = x_nchw.shape
    xr = x_nchw.reshape(N, C, H // 2, 2, W // 2, 2)
    return xr.mean(axis=(3, 5))


# --------------------------------------------------------------------------------------
if __name__ == "__main__":
    key = jax.random.PRNGKey(0)
    k1, k2, k3, k4 = jax.random.split(key, 4)

    # use_conv=True: channels=64 -> out_channels=128 (lane-dense Cout), 16x16 -> 8x8
    N, Cin, H, W = 2, 64, 16, 16
    Cout = 128
    x = jax.random.normal(k1, (N, Cin, H, W), jnp.float32)
    w = jax.random.normal(k2, (Cout, Cin, 3, 3), jnp.float32) / jnp.sqrt(9.0 * Cin)
    b = 0.1 * jax.random.normal(k3, (Cout,), jnp.float32)

    out_c = jax.block_until_ready(downsample_forward(x, True, w, b))
    ref_c = jax.block_until_ready(conv_down_ref(x, w, b))
    assert out_c.shape == (N, Cout, H // 2, W // 2), out_c.shape
    err_c = float(jnp.max(jnp.abs(out_c - ref_c)))

    # use_conv=False: avg-pool path (channels == out_channels), kept in f32.
    xp = jax.random.normal(k4, (N, Cin, H, W), jnp.float32)
    out_p = jax.block_until_ready(downsample_forward(xp, False))
    ref_p = jax.block_until_ready(avgpool_down_ref(xp))
    assert out_p.shape == (N, Cin, H // 2, W // 2), out_p.shape
    err_p = float(jnp.max(jnp.abs(out_p - ref_p)))

    # bf16 activations/weights on the MXU (f32 accumulate) => small rounding error on conv.
    if err_c < 5e-2 and err_p < 1e-5:
        print("KERNEL_OK")
    else:
        print(f"MISMATCH conv_err={err_c} pool_err={err_p}")
</pallas_src>

<mosaic_0001>
module attributes {stable_mosaic.version = 11 : i64} {
  func.func @conv_down_kernel(%arg0: i32, %arg1: memref<1x4x9x9x64xbf16, #tpu.memory_space<vmem>>, %arg2: memref<576x128xbf16, #tpu.memory_space<vmem>>, %arg3: memref<1x128xf32, #tpu.memory_space<vmem>>, %arg4: memref<1x64x128xf32, #tpu.memory_space<vmem>>) attributes {dimension_semantics = [#tpu.dimension_semantics<parallel>], iteration_bounds = array<i64: 2>, scalar_prefetch = 0 : i64, scratch_operands = 0 : i64, tpu.core_type = #tpu.core_type<tc>, window_params = [{transform_indices = @transform_0, window_bounds = array<i64: 1, 4, 9, 9, 64>}, {pipeline_mode = #tpu.pipeline_mode<synchronous>, transform_indices = @transform_1, window_bounds = array<i64: 576, 128>}, {pipeline_mode = #tpu.pipeline_mode<synchronous>, transform_indices = @transform_2, window_bounds = array<i64: 1, 128>}, {transform_indices = @transform_3, window_bounds = array<i64: 1, 64, 128>}]} {
    %cst = arith.constant 0.000000e+00 : f32
    %0 = vector.broadcast %cst : f32 to vector<64x128xf32>
    %c0 = arith.constant 0 : index
    %c0_0 = arith.constant 0 : index
    %c0_1 = arith.constant 0 : index
    %c0_2 = arith.constant 0 : index
    %c0_3 = arith.constant 0 : index
    %1 = vector.load %arg1[%c0, %c0_0, %c0_1, %c0_2, %c0_3] : memref<1x4x9x9x64xbf16, #tpu.memory_space<vmem>>, vector<1x1x8x8x64xbf16>
    %2 = vector.shape_cast %1 : vector<1x1x8x8x64xbf16> to vector<1x8x8x64xbf16>
    %3 = vector.shape_cast %2 : vector<1x8x8x64xbf16> to vector<64x64xbf16>
    %c0_4 = arith.constant 0 : index
    %c0_5 = arith.constant 0 : index
    %4 = vector.load %arg2[%c0_4, %c0_5] : memref<576x128xbf16, #tpu.memory_space<vmem>>, vector<64x128xbf16>
    %cst_6 = arith.constant dense<0.000000e+00> : vector<64x128xf32>
    %5 = tpu.matmul %3, %4, %cst_6 {dimension_numbers = #tpu.dot_dimension_numbers<[1], [0], [0], [1], [0, 0, 1, 1], [], []>} : vector<64x64xbf16>, vector<64x128xbf16>, vector<64x128xf32> -> vector<64x128xf32>
    %6 = arith.addf %0, %5 : vector<64x128xf32>
    %c0_7 = arith.constant 0 : index
    %c1 = arith.constant 1 : index
    %c0_8 = arith.constant 0 : index
    %c0_9 = arith.constant 0 : index
    %c0_10 = arith.constant 0 : index
    %7 = vector.load %arg1[%c0_7, %c1, %c0_8, %c0_9, %c0_10] : memref<1x4x9x9x64xbf16, #tpu.memory_space<vmem>>, vector<1x1x8x8x64xbf16>
    %8 = vector.shape_cast %7 : vector<1x1x8x8x64xbf16> to vector<1x8x8x64xbf16>
    %9 = vector.shape_cast %8 : vector<1x8x8x64xbf16> to vector<64x64xbf16>
    %c64 = arith.constant 64 : index
    %c0_11 = arith.constant 0 : index
    %10 = vector.load %arg2[%c64, %c0_11] : memref<576x128xbf16, #tpu.memory_space<vmem>>, vector<64x128xbf16>
    %cst_12 = arith.constant dense<0.000000e+00> : vector<64x128xf32>
    %11 = tpu.matmul %9, %10, %cst_12 {dimension_numbers = #tpu.dot_dimension_numbers<[1], [0], [0], [1], [0, 0, 1, 1], [], []>} : vector<64x64xbf16>, vector<64x128xbf16>, vector<64x128xf32> -> vector<64x128xf32>
    %12 = arith.addf %6, %11 : vector<64x128xf32>
    %c0_13 = arith.constant 0 : index
    %c0_14 = arith.constant 0 : index
    %c0_15 = arith.constant 0 : index
    %c1_16 = arith.constant 1 : index
    %c0_17 = arith.constant 0 : index
    %13 = vector.load %arg1[%c0_13, %c0_14, %c0_15, %c1_16, %c0_17] : memref<1x4x9x9x64xbf16, #tpu.memory_space<vmem>>, vector<1x1x8x8x64xbf16>
    %14 = vector.shape_cast %13 : vector<1x1x8x8x64xbf16> to vector<1x8x8x64xbf16>
    %15 = vector.shape_cast %14 : vector<1x8x8x64xbf16> to vector<64x64xbf16>
    %c128 = arith.constant 128 : index
    %c0_18 = arith.constant 0 : index
    %16 = vector.load %arg2[%c128, %c0_18] : memref<576x128xbf16, #tpu.memory_space<vmem>>, vector<64x128xbf16>
    %cst_19 = arith.constant dense<0.000000e+00> : vector<64x128xf32>
    %17 = tpu.matmul %15, %16, %cst_19 {dimension_numbers = #tpu.dot_dimension_numbers<[1], [0], [0], [1], [0, 0, 1, 1], [], []>} : vector<64x64xbf16>, vector<64x128xbf16>, vector<64x128xf32> -> vector<64x128xf32>
    %18 = arith.addf %12, %17 : vector<64x128xf32>
    %c0_20 = arith.constant 0 : index
    %c2 = arith.constant 2 : index
    %c0_21 = arith.constant 0 : index
    %c0_22 = arith.constant 0 : index
    %c0_23 = arith.constant 0 : index
    %19 = vector.load %arg1[%c0_20, %c2, %c0_21, %c0_22, %c0_23] : memref<1x4x9x9x64xbf16, #tpu.memory_space<vmem>>, vector<1x1x8x8x64xbf16>
    %20 = vector.shape_cast %19 : vector<1x1x8x8x64xbf16> to vector<1x8x8x64xbf16>
    %21 = vector.shape_cast %20 : vector<1x8x8x64xbf16> to vector<64x64xbf16>
    %c192 = arith.constant 192 : index
    %c0_24 = arith.constant 0 : index
    %22 = vector.load %arg2[%c192, %c0_24] : memref<576x128xbf16, #tpu.memory_space<vmem>>, vector<64x128xbf16>
    %cst_25 = arith.constant dense<0.000000e+00> : vector<64x128xf32>
    %23 = tpu.matmul %21, %22, %cst_25 {dimension_numbers = #tpu.dot_dimension_numbers<[1], [0], [0], [1], [0, 0, 1, 1], [], []>} : vector<64x64xbf16>, vector<64x128xbf16>, vector<64x128xf32> -> vector<64x128xf32>
    %24 = arith.addf %18, %23 : vector<64x128xf32>
    %c0_26 = arith.constant 0 : index
    %c3 = arith.constant 3 : index
    %c0_27 = arith.constant 0 : index
    %c0_28 = arith.constant 0 : index
    %c0_29 = arith.constant 0 : index
    %25 = vector.load %arg1[%c0_26, %c3, %c0_27, %c0_28, %c0_29] : memref<1x4x9x9x64xbf16, #tpu.memory_space<vmem>>, vector<1x1x8x8x64xbf16>
    %26 = vector.shape_cast %25 : vector<1x1x8x8x64xbf16> to vector<1x8x8x64xbf16>
    %27 = vector.shape_cast %26 : vector<1x8x8x64xbf16> to vector<64x64xbf16>
    %c256 = arith.constant 256 : index
    %c0_30 = arith.constant 0 : index
    %28 = vector.load %arg2[%c256, %c0_30] : memref<576x128xbf16, #tpu.memory_space<vmem>>, vector<64x128xbf16>
    %cst_31 = arith.constant dense<0.000000e+00> : vector<64x128xf32>
    %29 = tpu.matmul %27, %28, %cst_31 {dimension_numbers = #tpu.dot_dimension_numbers<[1], [0], [0], [1], [0, 0, 1, 1], [], []>} : vector<64x64xbf16>, vector<64x128xbf16>, vector<64x128xf32> -> vector<64x128xf32>
    %30 = arith.addf %24, %29 : vector<64x128xf32>
    %c0_32 = arith.constant 0 : index
    %c2_33 = arith.constant 2 : index
    %c0_34 = arith.constant 0 : index
    %c1_35 = arith.constant 1 : index
    %c0_36 = arith.constant 0 : index
    %31 = vector.load %arg1[%c0_32, %c2_33, %c0_34, %c1_35, %c0_36] : memref<1x4x9x9x64xbf16, #tpu.memory_space<vmem>>, vector<1x1x8x8x64xbf16>
    %32 = vector.shape_cast %31 : vector<1x1x8x8x64xbf16> to vector<1x8x8x64xbf16>
    %33 = vector.shape_cast %32 : vector<1x8x8x64xbf16> to vector<64x64xbf16>
    %c320 = arith.constant 320 : index
    %c0_37 = arith.constant 0 : index
    %34 = vector.load %arg2[%c320, %c0_37] : memref<576x128xbf16, #tpu.memory_space<vmem>>, vector<64x128xbf16>
    %cst_38 = arith.constant dense<0.000000e+00> : vector<64x128xf32>
    %35 = tpu.matmul %33, %34, %cst_38 {dimension_numbers = #tpu.dot_dimension_numbers<[1], [0], [0], [1], [0, 0, 1, 1], [], []>} : vector<64x64xbf16>, vector<64x128xbf16>, vector<64x128xf32> -> vector<64x128xf32>
    %36 = arith.addf %30, %35 : vector<64x128xf32>
    %c0_39 = arith.constant 0 : index
    %c0_40 = arith.constant 0 : index
    %c1_41 = arith.constant 1 : index
    %c0_42 = arith.constant 0 : index
    %c0_43 = arith.constant 0 : index
    %37 = vector.load %arg1[%c0_39, %c0_40, %c1_41, %c0_42, %c0_43] : memref<1x4x9x9x64xbf16, #tpu.memory_space<vmem>>, vector<1x1x8x8x64xbf16>
    %38 = vector.shape_cast %37 : vector<1x1x8x8x64xbf16> to vector<1x8x8x64xbf16>
    %39 = vector.shape_cast %38 : vector<1x8x8x64xbf16> to vector<64x64xbf16>
    %c384 = arith.constant 384 : index
    %c0_44 = arith.constant 0 : index
    %40 = vector.load %arg2[%c384, %c0_44] : memref<576x128xbf16, #tpu.memory_space<vmem>>, vector<64x128xbf16>
    %cst_45 = arith.constant dense<0.000000e+00> : vector<64x128xf32>
    %41 = tpu.matmul %39, %40, %cst_45 {dimension_numbers = #tpu.dot_dimension_numbers<[1], [0], [0], [1], [0, 0, 1, 1], [], []>} : vector<64x64xbf16>, vector<64x128xbf16>, vector<64x128xf32> -> vector<64x128xf32>
    %42 = arith.addf %36, %41 : vector<64x128xf32>
    %c0_46 = arith.constant 0 : index
    %c1_47 = arith.constant 1 : index
    %c1_48 = arith.constant 1 : index
    %c0_49 = arith.constant 0 : index
    %c0_50 = arith.constant 0 : index
    %43 = vector.load %arg1[%c0_46, %c1_47, %c1_48, %c0_49, %c0_50] : memref<1x4x9x9x64xbf16, #tpu.memory_space<vmem>>, vector<1x1x8x8x64xbf16>
    %44 = vector.shape_cast %43 : vector<1x1x8x8x64xbf16> to vector<1x8x8x64xbf16>
    %45 = vector.shape_cast %44 : vector<1x8x8x64xbf16> to vector<64x64xbf16>
    %c448 = arith.constant 448 : index
    %c0_51 = arith.constant 0 : index
    %46 = vector.load %arg2[%c448, %c0_51] : memref<576x128xbf16, #tpu.memory_space<vmem>>, vector<64x128xbf16>
    %cst_52 = arith.constant dense<0.000000e+00> : vector<64x128xf32>
    %47 = tpu.matmul %45, %46, %cst_52 {dimension_numbers = #tpu.dot_dimension_numbers<[1], [0], [0], [1], [0, 0, 1, 1], [], []>} : vector<64x64xbf16>, vector<64x128xbf16>, vector<64x128xf32> -> vector<64x128xf32>
    %48 = arith.addf %42, %47 : vector<64x128xf32>
    %c0_53 = arith.constant 0 : index
    %c0_54 = arith.constant 0 : index
    %c1_55 = arith.constant 1 : index
    %c1_56 = arith.constant 1 : index
    %c0_57 = arith.constant 0 : index
    %49 = vector.load %arg1[%c0_53, %c0_54, %c1_55, %c1_56, %c0_57] : memref<1x4x9x9x64xbf16, #tpu.memory_space<vmem>>, vector<1x1x8x8x64xbf16>
    %50 = vector.shape_cast %49 : vector<1x1x8x8x64xbf16> to vector<1x8x8x64xbf16>
    %51 = vector.shape_cast %50 : vector<1x8x8x64xbf16> to vector<64x64xbf16>
    %c512 = arith.constant 512 : index
    %c0_58 = arith.constant 0 : index
    %52 = vector.load %arg2[%c512, %c0_58] : memref<576x128xbf16, #tpu.memory_space<vmem>>, vector<64x128xbf16>
    %cst_59 = arith.constant dense<0.000000e+00> : vector<64x128xf32>
    %53 = tpu.matmul %51, %52, %cst_59 {dimension_numbers = #tpu.dot_dimension_numbers<[1], [0], [0], [1], [0, 0, 1, 1], [], []>} : vector<64x64xbf16>, vector<64x128xbf16>, vector<64x128xf32> -> vector<64x128xf32>
    %54 = arith.addf %48, %53 : vector<64x128xf32>
    %c0_60 = arith.constant 0 : index
    %c0_61 = arith.constant 0 : index
    %55 = vector.load %arg3[%c0_60, %c0_61] : memref<1x128xf32, #tpu.memory_space<vmem>>, vector<1x128xf32>
    %56 = vector.broadcast %55 : vector<1x128xf32> to vector<64x128xf32>
    %57 = arith.addf %54, %56 : vector<64x128xf32>
    %58 = vector.shape_cast %57 : vector<64x128xf32> to vector<1x64x128xf32>
    %c0_62 = arith.constant 0 : index
    %c0_63 = arith.constant 0 : index
    %c0_64 = arith.constant 0 : index
    %59 = vector.load %arg4[%c0_62, %c0_63, %c0_64] : memref<1x64x128xf32, #tpu.memory_space<vmem>>, vector<1x64x128xf32>
    tpu.vector_store %arg4[%c0_62, %c0_63, %c0_64], %58 {strides = array<i32>} : memref<1x64x128xf32, #tpu.memory_space<vmem>>, vector<1x64x128xf32>,
    return
  }
  func.func @transform_0(%arg0: i32) -> (i32, i32, i32, i32, i32) {
    %c0_i32 = arith.constant 0 : i32
    %c0_i32_0 = arith.constant 0 : i32
    %c0_i32_1 = arith.constant 0 : i32
    %c0_i32_2 = arith.constant 0 : i32
    %c0_i32_3 = arith.constant 0 : i32
    return %arg0, %c0_i32, %c0_i32_0, %c0_i32_1, %c0_i32_2 : i32, i32, i32, i32, i32
  }
  func.func @transform_1(%arg0: i32) -> (i32, i32) {
    %c0_i32 = arith.constant 0 : i32
    %c0_i32_0 = arith.constant 0 : i32
    %c0_i32_1 = arith.constant 0 : i32
    return %c0_i32, %c0_i32_0 : i32, i32
  }
  func.func @transform_2(%arg0: i32) -> (i32, i32) {
    %c0_i32 = arith.constant 0 : i32
    %c0_i32_0 = arith.constant 0 : i32
    %c0_i32_1 = arith.constant 0 : i32
    return %c0_i32, %c0_i32_0 : i32, i32
  }
  func.func @transform_3(%arg0: i32) -> (i32, i32, i32) {
    %c0_i32 = arith.constant 0 : i32
    %c0_i32_0 = arith.constant 0 : i32
    %c0_i32_1 = arith.constant 0 : i32
    return %arg0, %c0_i32, %c0_i32_0 : i32, i32, i32
  }
}

</mosaic_0001>

<llo_original>
// kernel: tpu_custom_call.1
$region0: #{tpu_custom_call.1}
  #allocation0 [shape = 'u32[]', space=smem, size = 0x4, offset = 0x4, fixed_abs, tag = 'smem constant byte address 0x4 - core index']
  #allocation1 [shape = 'u32[144,128]{1,0:T(1,128)}', space=vmem, size = 0x12000, scoped, tag = 'internal scratch']
  %s0 = inlined_call_operand.vmem [shape: bf16[2,4,9,9,64], index: 0, kind: input, shape index: {}]
  %s1 = inlined_call_operand.vmem [shape: bf16[576,128], index: 1, kind: input, shape index: {}]
  %s2 = inlined_call_operand.vmem [shape: f32[1,128], index: 2, kind: input, shape index: {}]
  %s3 = inlined_call_operand.hbm [shape: f32[2,64,128], index: 3, kind: output, shape index: {}]
  %s4 = sld [smem:[#allocation0]]
  $region45: #{tpu_custom_call.1} parent=0
    _
  %s6 = ssub.s32 1, %s4
  %s7 = scalar_select 0, %s6, %s4
  $region1: #{tpu_custom_call.1} parent=0
    #allocation2 [shape = 'u8[65536]{0}', space=vmem, size = 0x10000, scoped, tag = 'output window, operand 0']
    #allocation3 [shape = 's32[2]{0}', space=sflag, size = 0x8, scoped, tag = 'scoped memory for tpu_custom_call.1']
    %8 = vsyncpa [#allocation3], 0
    %s9 = scalar_lea.sflag [#allocation3], 1
    %10 = vsyncpa %s9, 0
    loop: start=0, step=1, limit=4
    $region2: #{tpu_custom_call.1} parent=1 // loop_pre_header
      _
    $region3: #{tpu_custom_call.1} parent=1 // loop_header
      %s12 = sphi 0, %s16
      %p13 = scmp.ge.s32.totalorder %s12, 4
      %s22 = sphi 0, %s24
      %s25 = sphi 0, %s22
      %s26 = sphi 0, %s25
      %s42 = sphi 0, %s26
      %s46 = sphi 0, %s46
      %s48 = sphi 0, %s46
      %s49 = sphi 0, %s48
      %s63 = sphi 0, %s49
      %s67 = sphi 0, %s67
      %s69 = sphi 0, %s67
      %s70 = sphi 0, %s69
      %s84 = sphi 0, %s70
      %s90 = sphi 0, %s92
      %s93 = sphi 0, %s90
      %s94 = sphi 0, %s93
      %s110 = sphi 0, %s94
    $region4: #{tpu_custom_call.1} parent=1 // loop_header_branch
      %15 = sbr.rel (%p13) target = $region8
    $region5: #{tpu_custom_call.1} parent=1 // loop_body
      %s17 = ssub.s32 %s12, 1
      %s18 = ssub.s32 %s12, 2
      %s19 = sadd.s32 %s12, 1
      %s20 = ssub.s32 %s12, %s19
      %p21 = scmp.eq.s32.totalorder %s20, 0
      %s23 = sadd.s32 %s22, 1
      %s24 = scalar_select %p21, %s22, %s23
      %p27 = pneg %p21
      %p28 = scmp.eq.s32.totalorder %s12, 1
      %p29 = por %p27, %p28
      %p30 = scmp.ne.s32.totalorder %s22, %s25
      %p31 = scmp.eq.s32.totalorder %s12, 0
      %p32 = por %p30, %p31
      %p33 = scmp.ne.s32.totalorder %s22, %s25
      %p34 = scmp.eq.s32.totalorder %s17, 1
      %p35 = por %p33, %p34
      %p36 = scmp.ne.s32.totalorder %s25, %s26
      %p37 = scmp.eq.s32.totalorder %s17, 0
      %p38 = por %p36, %p37
      %p39 = scmp.ne.s32.totalorder %s25, %s26
      %p40 = scmp.eq.s32.totalorder %s18, 1
      %p41 = por %p39, %p40
      %p43 = scmp.ne.s32.totalorder %s26, %s42
      %p44 = scmp.eq.s32.totalorder %s18, 0
      %p45 = por %p43, %p44
      %s47 = sadd.s32 %s46, 1
      %p50 = scmp.eq.s32.totalorder %s12, 1
      %p51 = scmp.ne.s32.totalorder %s46, %s48
      %p52 = scmp.eq.s32.totalorder %s12, 0
      %p53 = por %p51, %p52
      %p54 = scmp.ne.s32.totalorder %s46, %s48
      %p55 = scmp.eq.s32.totalorder %s17, 1
      %p56 = por %p54, %p55
      %p57 = scmp.ne.s32.totalorder %s48, %s49
      %p58 = scmp.eq.s32.totalorder %s17, 0
      %p59 = por %p57, %p58
      %p60 = scmp.ne.s32.totalorder %s48, %s49
      %p61 = scmp.eq.s32.totalorder %s18, 1
      %p62 = por %p60, %p61
      %p64 = scmp.ne.s32.totalorder %s49, %s63
      %p65 = scmp.eq.s32.totalorder %s18, 0
      %p66 = por %p64, %p65
      %s68 = sadd.s32 %s67, 1
      %p71 = scmp.eq.s32.totalorder %s12, 1
      %p72 = scmp.ne.s32.totalorder %s67, %s69
      %p73 = scmp.eq.s32.totalorder %s12, 0
      %p74 = por %p72, %p73
      %p75 = scmp.ne.s32.totalorder %s67, %s69
      %p76 = scmp.eq.s32.totalorder %s17, 1
      %p77 = por %p75, %p76
      %p78 = scmp.ne.s32.totalorder %s69, %s70
      %p79 = scmp.eq.s32.totalorder %s17, 0
      %p80 = por %p78, %p79
      %p81 = scmp.ne.s32.totalorder %s69, %s70
      %p82 = scmp.eq.s32.totalorder %s18, 1
      %p83 = por %p81, %p82
      %p85 = scmp.ne.s32.totalorder %s70, %s84
      %p86 = scmp.eq.s32.totalorder %s18, 0
      %p87 = por %p85, %p86
      %s88 = ssub.s32 %s12, %s19
      %p89 = scmp.eq.s32.totalorder %s88, 0
      %s91 = sadd.s32 %s90, 1
      %s92 = scalar_select %p89, %s90, %s91
      %p95 = pneg %p89
      %p96 = scmp.eq.s32.totalorder %s12, 1
      %p97 = por %p95, %p96
      %p98 = scmp.ne.s32.totalorder %s90, %s93
      %p99 = scmp.eq.s32.totalorder %s12, 0
      %p100 = por %p98, %p99
      %p101 = scmp.ne.s32.totalorder %s90, %s93
      %p102 = scmp.eq.s32.totalorder %s17, 1
      %p103 = por %p101, %p102
      %p104 = scmp.ne.s32.totalorder %s93, %s94
      %p105 = scmp.eq.s32.totalorder %s17, 0
      %p106 = por %p104, %p105
      %p107 = scmp.ne.s32.totalorder %s93, %s94
      %p108 = scmp.eq.s32.totalorder %s18, 1
      %p109 = por %p107, %p108
      %p111 = scmp.ne.s32.totalorder %s94, %s110
      %p112 = scmp.eq.s32.totalorder %s18, 0
      %p113 = por %p111, %p112
      %p114 = scmp.le.s32.totalorder 1, %s12
      %p115 = scmp.lt.s32.totalorder %s12, 3
      %p116 = pnand %p114, %p115
      %p117 = pneg %p116
      // Predicated region
      $region9: #{tpu_custom_call.1} parent=5 // pred_check
        _
      $region10: #{tpu_custom_call.1} parent=5 // pred_check_branch
        %119 = sbr.rel (%p116) target = $region12
      $region11: #{tpu_custom_call.1} parent=5 // pred_region
        %s120 = ssub.s32 %s12, 1
        // Predicated region
        $region13: #{tpu_custom_call.1} parent=11 // pred_check
          %p121 = pneg %p59
        $region14: #{tpu_custom_call.1} parent=11 // pred_check_branch
          %123 = sbr.rel (%p121) target = $region16
        $region15: #{tpu_custom_call.1} parent=11 // pred_region
          _
        $region16: #{tpu_custom_call.1} parent=11 // pred_fallthru
          _
        // Predicated region
        $region17: #{tpu_custom_call.1} parent=11 // pred_check
          %p124 = pneg %p80
        $region18: #{tpu_custom_call.1} parent=11 // pred_check_branch
          %126 = sbr.rel (%p124) target = $region20
        $region19: #{tpu_custom_call.1} parent=11 // pred_region
          _
        $region20: #{tpu_custom_call.1} parent=11 // pred_fallthru
          _
      $region12: #{tpu_custom_call.1} parent=5 // pred_fallthru
        _
      %p127 = scmp.lt.s32.totalorder %s12, 2
      // Predicated region
      $region21: #{tpu_custom_call.1} parent=5 // pred_check
        %p128 = pneg %p127
      $region22: #{tpu_custom_call.1} parent=5 // pred_check_branch
        %130 = sbr.rel (%p128) target = $region24
      $region23: #{tpu_custom_call.1} parent=5 // pred_region
        // Predicated region
        $region25: #{tpu_custom_call.1} parent=23 // pred_check
          %p131 = pneg %p32
        $region26: #{tpu_custom_call.1} parent=23 // pred_check_branch
          %133 = sbr.rel (%p131) target = $region28
        $region27: #{tpu_custom_call.1} parent=23 // pred_region
          %p134 = scmp.lt.s32.totalorder %s12, 1
          %s135 = scalar_select %p134, %s12, 1
          %s136 = smul.addr %s135, 72
          %s137 = smul.addr %s136, 4
          %s138 = scalar_lea.vmem %s0, %s137
        $region28: #{tpu_custom_call.1} parent=23 // pred_fallthru
          _
      $region24: #{tpu_custom_call.1} parent=5 // pred_fallthru
        _
      %p139 = scmp.le.s32.totalorder 1, %s12
      %p140 = scmp.lt.s32.totalorder %s12, 3
      %p141 = pnand %p139, %p140
      %p142 = pneg %p141
      // Predicated region
      $region29: #{tpu_custom_call.1} parent=5 // pred_check
        _
      $region30: #{tpu_custom_call.1} parent=5 // pred_check_branch
        %144 = sbr.rel (%p141) target = $region32
      $region31: #{tpu_custom_call.1} parent=5 // pred_region
        %s145 = ssub.s32 %s12, 1
        %p146 = scmp.lt.s32.totalorder %s17, 1
        %s147 = scalar_select %p146, %s17, 1
        %s148 = smul.addr %s147, 72
        %s149 = smul.addr %s148, 4
        %s150 = scalar_lea.vmem %s0, %s149
        %p151 = pneg %p38
        %p152 = pneg %p35
        %p153 = pneg %p59
        %p154 = pneg %p56
        %p155 = pneg %p80
        %p156 = pneg %p77
        %p157 = pneg %p106
        %p158 = pneg %p103
        %s159 = sand.u32 %s93, 1
        %s160 = scalar_lea.sflag [#allocation3], %s159
        %s161 = sand.u32 %s93, 1
        %s162 = smul.addr %s161, 64
        %s163 = scalar_lea.vmem [#allocation2], %s162
        %p164 = scmp.lt.s32.totalorder %s17, 1
        %s165 = scalar_select %p164, %s17, 1
        %s166 = smul.addr %s165, 72
        %s167 = smul.addr %s166, 4
        %s168 = scalar_lea.vmem %s0, %s167
        %v170 = vld [vmem:[%s168] sm:$0xf]
        %v171 = vld [vmem:[%s168 + $0x8] sm:$0xf]
        %v172 = vld [vmem:[%s168 + $0x10] sm:$0xf]
        %v173 = vld [vmem:[%s168 + $0x18] sm:$0xf]
        %v174 = vld [vmem:[%s168 + $0x20] sm:$0xf]
        %v175 = vld [vmem:[%s168 + $0x28] sm:$0xf]
        %v176 = vld [vmem:[%s168 + $0x30] sm:$0xf]
        %v177 = vld [vmem:[%s168 + $0x38] sm:$0xf]
        %v178 = vld [vmem:[%s1] sm:$0xf]
        %v179 = vld [vmem:[%s1 + $0x4] sm:$0xf]
        %v180 = vld [vmem:[%s1 + $0x8] sm:$0xf]
        %v181 = vld [vmem:[%s1 + $0xc] sm:$0xf]
        %v182 = vld [vmem:[%s1 + $0x10] sm:$0xf]
        %v183 = vld [vmem:[%s1 + $0x14] sm:$0xf]
        %v184 = vld [vmem:[%s1 + $0x18] sm:$0xf]
        %v185 = vld [vmem:[%s1 + $0x1c] sm:$0xf]
        %s186 = scalar_lea.vmem %s168, 72
        %v187 = vld [vmem:[%s186] sm:$0xf]
        %v188 = vld [vmem:[%s186 + $0x8] sm:$0xf]
        %v189 = vld [vmem:[%s186 + $0x10] sm:$0xf]
        %v190 = vld [vmem:[%s186 + $0x18] sm:$0xf]
        %v191 = vld [vmem:[%s186 + $0x20] sm:$0xf]
        %v192 = vld [vmem:[%s186 + $0x28] sm:$0xf]
        %v193 = vld [vmem:[%s186 + $0x30] sm:$0xf]
        %v194 = vld [vmem:[%s186 + $0x38] sm:$0xf]
        %v195 = vld [vmem:[%s1 + $0x20] sm:$0xf]
        %v196 = vld [vmem:[%s1 + $0x24] sm:$0xf]
        %v197 = vld [vmem:[%s1 + $0x28] sm:$0xf]
        %v198 = vld [vmem:[%s1 + $0x2c] sm:$0xf]
        %v199 = vld [vmem:[%s1 + $0x30] sm:$0xf]
        %v200 = vld [vmem:[%s1 + $0x34] sm:$0xf]
        %v201 = vld [vmem:[%s1 + $0x38] sm:$0xf]
        %v202 = vld [vmem:[%s1 + $0x3c] sm:$0xf]
        %v211 = vunpack.c.l.b16 %v187
        %v212 = vunpack.c.l.b16 %v188
        %v213 = vunpack.c.l.b16 %v189
        %v214 = vunpack.c.l.b16 %v190
        %v215 = vunpack.c.l.b16 %v191
        %v216 = vunpack.c.l.b16 %v192
        %v217 = vunpack.c.l.b16 %v193
        %v218 = vunpack.c.l.b16 %v194
        %v219 = vpack.c.b16 %v212, %v211
        %v220 = vpack.c.b16 %v214, %v213
        %v221 = vpack.c.b16 %v216, %v215
        %v222 = vpack.c.b16 %v218, %v217
        %v231 = vunpack.c.l.b16 %v195
        %v232 = vunpack.c.l.b16 %v196
        %v233 = vunpack.c.l.b16 %v197
        %v234 = vunpack.c.l.b16 %v198
        %v235 = vunpack.c.l.b16 %v199
        %v236 = vunpack.c.l.b16 %v200
        %v237 = vunpack.c.l.b16 %v201
        %v238 = vunpack.c.l.b16 %v202
        %v239 = vpack.c.b16 %v232, %v231
        %v240 = vpack.c.b16 %v234, %v233
        %v241 = vpack.c.b16 %v236, %v235
        %v242 = vpack.c.b16 %v238, %v237
        %vm247 = vcmask 523264
        %v249 = vsel %vm247, %v219, 0
        %v252 = vsel %vm247, %v220, 0
        %v255 = vsel %vm247, %v221, 0
        %v258 = vsel %vm247, %v222, 0
        %260 = vmatprep.subr.bf16.mxu0 0
        %261 = vmatpush1.bf16.msra.mxu0 %v239
        %262 = vmatprep.subr.bf16.mxu0 0
        %263 = vmatpush1.bf16.msra.mxu0 %v240
        %264 = vmatprep.subr.bf16.mxu0 0
        %265 = vmatpush1.bf16.msra.mxu0 %v241
        %266 = vmatprep.subr.bf16.mxu0 0
        %267 = vmatpush1.bf16.msra.mxu0 %v242
        %268 = vmatprep.subr.bf16.mxu0 0
        %269 = vmatpush1.bf16.msra.mxu0 0
        %270 = vmatprep.subr.bf16.mxu0 0
        %271 = vmatpush1.bf16.msra.mxu0 0
        %272 = vmatprep.subr.bf16.mxu0 0
        %273 = vmatpush1.bf16.msra.mxu0 0
        %274 = vmatprep.subr.bf16.mxu0 0
        %275 = vmatpush1.bf16.msra.mxu0 0
        %276 = vmatprep.subr.bf16.mxu0 0
        %277 = vmatpush1.bf16.msra.mxu0 0
        %278 = vmatprep.subr.bf16.mxu0 0
        %279 = vmatpush1.bf16.msra.mxu0 0
        %280 = vmatprep.subr.bf16.mxu0 0
        %281 = vmatpush1.bf16.msra.mxu0 0
        %282 = vmatprep.subr.bf16.mxu0 0
        %283 = vmatpush1.bf16.msra.mxu0 0
        %284 = vmatprep.subr.bf16.mxu0 0
        %285 = vmatpush1.bf16.msra.mxu0 0
        %286 = vmatprep.subr.bf16.mxu0 0
        %287 = vmatpush1.bf16.msra.mxu0 0
        %288 = vmatprep.subr.bf16.mxu0 0
        %289 = vmatpush1.bf16.msra.mxu0 0
        %290 = vmatprep.subr.bf16.mxu0 0
        %291 = vmatpush1.bf16.msra.mxu0 0
        %292 = vmatprep.mubr.bf16.mxu0 0
        %293 = vmatmul.mubr.bf16.gmra.mrb[0].mxu0 %v249
        %v294 = vpop.f32.mrb[0].mxu0
        %v295 = vadd.f32 0.0, %v294
        %v296 = vpop.f32.mrb[0].mxu0
        %v297 = vpop.f32.mrb[0].mxu0
        %v298 = vadd.f32 0.0, %v297
        %v299 = vpop.f32.mrb[0].mxu0
        %300 = vmatprep.mubr.bf16.mxu0 0
        %301 = vmatmul.mubr.bf16.gmra.mrb[0].mxu0 %v252
        %v302 = vpop.f32.mrb[0].mxu0
        %v303 = vadd.f32 0.0, %v302
        %v304 = vpop.f32.mrb[0].mxu0
        %v305 = vpop.f32.mrb[0].mxu0
        %v306 = vadd.f32 0.0, %v305
        %v307 = vpop.f32.mrb[0].mxu0
        %308 = vmatprep.mubr.bf16.mxu0 0
        %309 = vmatmul.mubr.bf16.gmra.mrb[0].mxu0 %v255
        %v310 = vpop.f32.mrb[0].mxu0
        %v311 = vadd.f32 0.0, %v310
        %v312 = vpop.f32.mrb[0].mxu0
        %v313 = vpop.f32.mrb[0].mxu0
        %v314 = vadd.f32 0.0, %v313
        %v315 = vpop.f32.mrb[0].mxu0
        %316 = vmatprep.mubr.bf16.mxu0 0
        %317 = vmatmul.mubr.bf16.gmra.mrb[0].mxu0 %v258
        %v318 = vpop.f32.mrb[0].mxu0
        %v319 = vadd.f32 0.0, %v318
        %v320 = vpop.f32.mrb[0].mxu0
        %v321 = vpop.f32.mrb[0].mxu0
        %v322 = vadd.f32 0.0, %v321
        %v323 = vpop.f32.mrb[0].mxu0
        %324 = vdwg.mxu0
        %v333 = vunpack.c.l.b16 %v170
        %v334 = vunpack.c.l.b16 %v171
        %v335 = vunpack.c.l.b16 %v172
        %v336 = vunpack.c.l.b16 %v173
        %v337 = vunpack.c.l.b16 %v174
        %v338 = vunpack.c.l.b16 %v175
        %v339 = vunpack.c.l.b16 %v176
        %v340 = vunpack.c.l.b16 %v177
        %v341 = vpack.c.b16 %v334, %v333
        %v342 = vpack.c.b16 %v336, %v335
        %v343 = vpack.c.b16 %v338, %v337
        %v344 = vpack.c.b16 %v340, %v339
        %v353 = vunpack.c.l.b16 %v178
        %v354 = vunpack.c.l.b16 %v179
        %v355 = vunpack.c.l.b16 %v180
        %v356 = vunpack.c.l.b16 %v181
        %v357 = vunpack.c.l.b16 %v182
        %v358 = vunpack.c.l.b16 %v183
        %v359 = vunpack.c.l.b16 %v184
        %v360 = vunpack.c.l.b16 %v185
        %v361 = vpack.c.b16 %v354, %v353
        %v362 = vpack.c.b16 %v356, %v355
        %v363 = vpack.c.b16 %v358, %v357
        %v364 = vpack.c.b16 %v360, %v359
        %v370 = vsel %vm247, %v341, 0
        %v373 = vsel %vm247, %v342, 0
        %v376 = vsel %vm247, %v343, 0
        %v379 = vsel %vm247, %v344, 0
        %381 = vmatprep.subr.bf16.mxu0 0
        %382 = vmatpush1.bf16.msra.mxu0 %v361
        %383 = vmatprep.subr.bf16.mxu0 0
        %384 = vmatpush1.bf16.msra.mxu0 %v362
        %385 = vmatprep.subr.bf16.mxu0 0
        %386 = vmatpush1.bf16.msra.mxu0 %v363
        %387 = vmatprep.subr.bf16.mxu0 0
        %388 = vmatpush1.bf16.msra.mxu0 %v364
        %389 = vmatprep.subr.bf16.mxu0 0
        %390 = vmatpush1.bf16.msra.mxu0 0
        %391 = vmatprep.subr.bf16.mxu0 0
        %392 = vmatpush1.bf16.msra.mxu0 0
        %393 = vmatprep.subr.bf16.mxu0 0
        %394 = vmatpush1.bf16.msra.mxu0 0
        %395 = vmatprep.subr.bf16.mxu0 0
        %396 = vmatpush1.bf16.msra.mxu0 0
        %397 = vmatprep.subr.bf16.mxu0 0
        %398 = vmatpush1.bf16.msra.mxu0 0
        %399 = vmatprep.subr.bf16.mxu0 0
        %400 = vmatpush1.bf16.msra.mxu0 0
        %401 = vmatprep.subr.bf16.mxu0 0
        %402 = vmatpush1.bf16.msra.mxu0 0
        %403 = vmatprep.subr.bf16.mxu0 0
        %404 = vmatpush1.bf16.msra.mxu0 0
        %405 = vmatprep.subr.bf16.mxu0 0
        %406 = vmatpush1.bf16.msra.mxu0 0
        %407 = vmatprep.subr.bf16.mxu0 0
        %408 = vmatpush1.bf16.msra.mxu0 0
        %409 = vmatprep.subr.bf16.mxu0 0
        %410 = vmatpush1.bf16.msra.mxu0 0
        %411 = vmatprep.subr.bf16.mxu0 0
        %412 = vmatpush1.bf16.msra.mxu0 0
        %413 = vmatprep.mubr.bf16.mxu0 0
        %414 = vmatmul.mubr.bf16.gmra.mrb[0].mxu0 %v370
        %v415 = vpop.f32.mrb[0].mxu0
        %v416 = vadd.f32 %v295, %v415
        %v417 = vpop.f32.mrb[0].mxu0
        %v418 = vpop.f32.mrb[0].mxu0
        %v419 = vadd.f32 %v298, %v418
        %v420 = vpop.f32.mrb[0].mxu0
        %421 = vmatprep.mubr.bf16.mxu0 0
        %422 = vmatmul.mubr.bf16.gmra.mrb[0].mxu0 %v373
        %v423 = vpop.f32.mrb[0].mxu0
        %v424 = vadd.f32 %v303, %v423
        %v425 = vpop.f32.mrb[0].mxu0
        %v426 = vpop.f32.mrb[0].mxu0
        %v427 = vadd.f32 %v306, %v426
        %v428 = vpop.f32.mrb[0].mxu0
        %429 = vmatprep.mubr.bf16.mxu0 0
        %430 = vmatmul.mubr.bf16.gmra.mrb[0].mxu0 %v376
        %v431 = vpop.f32.mrb[0].mxu0
        %v432 = vadd.f32 %v311, %v431
        %v433 = vpop.f32.mrb[0].mxu0
        %v434 = vpop.f32.mrb[0].mxu0
        %v435 = vadd.f32 %v314, %v434
        %v436 = vpop.f32.mrb[0].mxu0
        %437 = vmatprep.mubr.bf16.mxu0 0
        %438 = vmatmul.mubr.bf16.gmra.mrb[0].mxu0 %v379
        %v439 = vpop.f32.mrb[0].mxu0
        %v440 = vadd.f32 %v319, %v439
        %v441 = vpop.f32.mrb[0].mxu0
        %v442 = vpop.f32.mrb[0].mxu0
        %v443 = vadd.f32 %v322, %v442
        %v444 = vpop.f32.mrb[0].mxu0
        %445 = vdwg.mxu0
        %v446 = vld [vmem:[%s168] sm:$0xf]
        %v447 = vld [vmem:[%s168 + $0x4] sm:$0x1]
        %v448 = vld [vmem:[%s168 + $0x8] sm:$0xf]
        %v449 = vld [vmem:[%s168 + $0xc] sm:$0x1]
        %v450 = vld [vmem:[%s168 + $0x10] sm:$0xf]
        %v451 = vld [vmem:[%s168 + $0x14] sm:$0x1]
        %v452 = vld [vmem:[%s168 + $0x18] sm:$0xf]
        %v453 = vld [vmem:[%s168 + $0x1c] sm:$0x1]
        %v454 = vld [vmem:[%s168 + $0x20] sm:$0xf]
        %v455 = vld [vmem:[%s168 + $0x24] sm:$0x1]
        %v456 = vld [vmem:[%s168 + $0x28] sm:$0xf]
        %v457 = vld [vmem:[%s168 + $0x2c] sm:$0x1]
        %v458 = vld [vmem:[%s168 + $0x30] sm:$0xf]
        %v459 = vld [vmem:[%s168 + $0x34] sm:$0x1]
        %v460 = vld [vmem:[%s168 + $0x38] sm:$0xf]
        %v461 = vld [vmem:[%s168 + $0x3c] sm:$0x1]
        %vm462 = vsmask.f32 3328
        %vm463 = vsmask.f32 7440
        %vm464 = vmor %vm462, %vm463
        %v466 = vshrl.u32 %v446, 16
        %v468 = vrot.slane %v466, 4
        %v469 = vshll.u32 %v446, 16
        %v471 = vrot.slane %v469, 5
        %v472 = vor.u32 %v468, %v471
        %v473 = vrot.slane %v472, 4
        %v475 = vshll.u32 %v447, 16
        %v477 = vrot.slane %v475, 5
        %v478 = vsel %vm464, %v473, %v477
        %v480 = vshrl.u32 %v448, 16
        %v482 = vrot.slane %v480, 4
        %v483 = vshll.u32 %v448, 16
        %v485 = vrot.slane %v483, 5
        %v486 = vor.u32 %v482, %v485
        %v487 = vrot.slane %v486, 4
        %v489 = vshll.u32 %v449, 16
        %v491 = vrot.slane %v489, 5
        %v492 = vsel %vm464, %v487, %v491
        %v494 = vshrl.u32 %v450, 16
        %v496 = vrot.slane %v494, 4
        %v497 = vshll.u32 %v450, 16
        %v499 = vrot.slane %v497, 5
        %v500 = vor.u32 %v496, %v499
        %v501 = vrot.slane %v500, 4
        %v503 = vshll.u32 %v451, 16
        %v505 = vrot.slane %v503, 5
        %v506 = vsel %vm464, %v501, %v505
        %v508 = vshrl.u32 %v452, 16
        %v510 = vrot.slane %v508, 4
        %v511 = vshll.u32 %v452, 16
        %v513 = vrot.slane %v511, 5
        %v514 = vor.u32 %v510, %v513
        %v515 = vrot.slane %v514, 4
        %v517 = vshll.u32 %v453, 16
        %v519 = vrot.slane %v517, 5
        %v520 = vsel %vm464, %v515, %v519
        %v522 = vshrl.u32 %v454, 16
        %v524 = vrot.slane %v522, 4
        %v525 = vshll.u32 %v454, 16
        %v527 = vrot.slane %v525, 5
        %v528 = vor.u32 %v524, %v527
        %v529 = vrot.slane %v528, 4
        %v531 = vshll.u32 %v455, 16
        %v533 = vrot.slane %v531, 5
        %v534 = vsel %vm464, %v529, %v533
        %v536 = vshrl.u32 %v456, 16
        %v538 = vrot.slane %v536, 4
        %v539 = vshll.u32 %v456, 16
        %v541 = vrot.slane %v539, 5
        %v542 = vor.u32 %v538, %v541
        %v543 = vrot.slane %v542, 4
        %v545 = vshll.u32 %v457, 16
        %v547 = vrot.slane %v545, 5
        %v548 = vsel %vm464, %v543, %v547
        %v550 = vshrl.u32 %v458, 16
        %v552 = vrot.slane %v550, 4
        %v553 = vshll.u32 %v458, 16
        %v555 = vrot.slane %v553, 5
        %v556 = vor.u32 %v552, %v555
        %v557 = vrot.slane %v556, 4
        %v559 = vshll.u32 %v459, 16
        %v561 = vrot.slane %v559, 5
        %v562 = vsel %vm464, %v557, %v561
        %v564 = vshrl.u32 %v460, 16
        %v566 = vrot.slane %v564, 4
        %v567 = vshll.u32 %v460, 16
        %v569 = vrot.slane %v567, 5
        %v570 = vor.u32 %v566, %v569
        %v571 = vrot.slane %v570, 4
        %v573 = vshll.u32 %v461, 16
        %v575 = vrot.slane %v573, 5
        %v576 = vsel %vm464, %v571, %v575
        %v577 = vld [vmem:[%s1 + $0x40] sm:$0xf]
        %v578 = vld [vmem:[%s1 + $0x44] sm:$0xf]
        %v579 = vld [vmem:[%s1 + $0x48] sm:$0xf]
        %v580 = vld [vmem:[%s1 + $0x4c] sm:$0xf]
        %v581 = vld [vmem:[%s1 + $0x50] sm:$0xf]
        %v582 = vld [vmem:[%s1 + $0x54] sm:$0xf]
        %v583 = vld [vmem:[%s1 + $0x58] sm:$0xf]
        %v584 = vld [vmem:[%s1 + $0x5c] sm:$0xf]
        %v585 = vunpack.c.l.b16 %v478
        %v586 = vunpack.c.l.b16 %v492
        %v587 = vunpack.c.l.b16 %v506
        %v588 = vunpack.c.l.b16 %v520
        %v589 = vunpack.c.l.b16 %v534
        %v590 = vunpack.c.l.b16 %v548
        %v591 = vunpack.c.l.b16 %v562
        %v592 = vunpack.c.l.b16 %v576
        %v593 = vpack.c.b16 %v586, %v585
        %v594 = vpack.c.b16 %v588, %v587
        %v595 = vpack.c.b16 %v590, %v589
        %v596 = vpack.c.b16 %v592, %v591
        %v605 = vunpack.c.l.b16 %v577
        %v606 = vunpack.c.l.b16 %v578
        %v607 = vunpack.c.l.b16 %v579
        %v608 = vunpack.c.l.b16 %v580
        %v609 = vunpack.c.l.b16 %v581
        %v610 = vunpack.c.l.b16 %v582
        %v611 = vunpack.c.l.b16 %v583
        %v612 = vunpack.c.l.b16 %v584
        %v613 = vpack.c.b16 %v606, %v605
        %v614 = vpack.c.b16 %v608, %v607
        %v615 = vpack.c.b16 %v610, %v609
        %v616 = vpack.c.b16 %v612, %v611
        %v622 = vsel %vm247, %v593, 0
        %v625 = vsel %vm247, %v594, 0
        %v628 = vsel %vm247, %v595, 0
        %v631 = vsel %vm247, %v596, 0
        %633 = vmatprep.subr.bf16.mxu0 0
        %634 = vmatpush1.bf16.msra.mxu0 %v613
        %635 = vmatprep.subr.bf16.mxu0 0
        %636 = vmatpush1.bf16.msra.mxu0 %v614
        %637 = vmatprep.subr.bf16.mxu0 0
        %638 = vmatpush1.bf16.msra.mxu0 %v615
        %639 = vmatprep.subr.bf16.mxu0 0
        %640 = vmatpush1.bf16.msra.mxu0 %v616
        %641 = vmatprep.subr.bf16.mxu0 0
        %642 = vmatpush1.bf16.msra.mxu0 0
        %643 = vmatprep.subr.bf16.mxu0 0
        %644 = vmatpush1.bf16.msra.mxu0 0
        %645 = vmatprep.subr.bf16.mxu0 0
        %646 = vmatpush1.bf16.msra.mxu0 0
        %647 = vmatprep.subr.bf16.mxu0 0
        %648 = vmatpush1.bf16.msra.mxu0 0
        %649 = vmatprep.subr.bf16.mxu0 0
        %650 = vmatpush1.bf16.msra.mxu0 0
        %651 = vmatprep.subr.bf16.mxu0 0
        %652 = vmatpush1.bf16.msra.mxu0 0
        %653 = vmatprep.subr.bf16.mxu0 0
        %654 = vmatpush1.bf16.msra.mxu0 0
        %655 = vmatprep.subr.bf16.mxu0 0
        %656 = vmatpush1.bf16.msra.mxu0 0
        %657 = vmatprep.subr.bf16.mxu0 0
        %658 = vmatpush1.bf16.msra.mxu0 0
        %659 = vmatprep.subr.bf16.mxu0 0
        %660 = vmatpush1.bf16.msra.mxu0 0
        %661 = vmatprep.subr.bf16.mxu0 0
        %662 = vmatpush1.bf16.msra.mxu0 0
        %663 = vmatprep.subr.bf16.mxu0 0
        %664 = vmatpush1.bf16.msra.mxu0 0
        %665 = vmatprep.mubr.bf16.mxu0 0
        %666 = vmatmul.mubr.bf16.gmra.mrb[0].mxu0 %v622
        %v667 = vpop.f32.mrb[0].mxu0
        %v668 = vadd.f32 0.0, %v667
        %v669 = vpop.f32.mrb[0].mxu0
        %v670 = vpop.f32.mrb[0].mxu0
        %v671 = vadd.f32 0.0, %v670
        %v672 = vpop.f32.mrb[0].mxu0
        %673 = vmatprep.mubr.bf16.mxu0 0
        %674 = vmatmul.mubr.bf16.gmra.mrb[0].mxu0 %v625
        %v675 = vpop.f32.mrb[0].mxu0
        %v676 = vadd.f32 0.0, %v675
        %v677 = vpop.f32.mrb[0].mxu0
        %v678 = vpop.f32.mrb[0].mxu0
        %v679 = vadd.f32 0.0, %v678
        %v680 = vpop.f32.mrb[0].mxu0
        %681 = vmatprep.mubr.bf16.mxu0 0
        %682 = vmatmul.mubr.bf16.gmra.mrb[0].mxu0 %v628
        %v683 = vpop.f32.mrb[0].mxu0
        %v684 = vadd.f32 0.0, %v683
        %v685 = vpop.f32.mrb[0].mxu0
        %v686 = vpop.f32.mrb[0].mxu0
        %v687 = vadd.f32 0.0, %v686
        %v688 = vpop.f32.mrb[0].mxu0
        %689 = vmatprep.mubr.bf16.mxu0 0
        %690 = vmatmul.mubr.bf16.gmra.mrb[0].mxu0 %v631
        %v691 = vpop.f32.mrb[0].mxu0
        %v692 = vadd.f32 0.0, %v691
        %v693 = vpop.f32.mrb[0].mxu0
        %v694 = vpop.f32.mrb[0].mxu0
        %v695 = vadd.f32 0.0, %v694
        %v696 = vpop.f32.mrb[0].mxu0
        %697 = vdwg.mxu0
        %v698 = vadd.f32 %v416, %v668
        %v699 = vadd.f32 %v419, %v671
        %v700 = vadd.f32 %v424, %v676
        %v701 = vadd.f32 %v427, %v679
        %v702 = vadd.f32 %v432, %v684
        %v703 = vadd.f32 %v435, %v687
        %v704 = vadd.f32 %v440, %v692
        %v705 = vadd.f32 %v443, %v695
        %s706 = scalar_lea.vmem %s168, 144
        %v707 = vld [vmem:[%s706] sm:$0xf]
        %v708 = vld [vmem:[%s706 + $0x8] sm:$0xf]
        %v709 = vld [vmem:[%s706 + $0x10] sm:$0xf]
        %v710 = vld [vmem:[%s706 + $0x18] sm:$0xf]
        %v711 = vld [vmem:[%s706 + $0x20] sm:$0xf]
        %v712 = vld [vmem:[%s706 + $0x28] sm:$0xf]
        %v713 = vld [vmem:[%s706 + $0x30] sm:$0xf]
        %v714 = vld [vmem:[%s706 + $0x38] sm:$0xf]
        %v715 = vld [vmem:[%s1 + $0x60] sm:$0xf]
        %v716 = vld [vmem:[%s1 + $0x64] sm:$0xf]
        %v717 = vld [vmem:[%s1 + $0x68] sm:$0xf]
        %v718 = vld [vmem:[%s1 + $0x6c] sm:$0xf]
        %v719 = vld [vmem:[%s1 + $0x70] sm:$0xf]
        %v720 = vld [vmem:[%s1 + $0x74] sm:$0xf]
        %v721 = vld [vmem:[%s1 + $0x78] sm:$0xf]
        %v722 = vld [vmem:[%s1 + $0x7c] sm:$0xf]
        %v731 = vunpack.c.l.b16 %v707
        %v732 = vunpack.c.l.b16 %v708
        %v733 = vunpack.c.l.b16 %v709
        %v734 = vunpack.c.l.b16 %v710
        %v735 = vunpack.c.l.b16 %v711
        %v736 = vunpack.c.l.b16 %v712
        %v737 = vunpack.c.l.b16 %v713
        %v738 = vunpack.c.l.b16 %v714
        %v739 = vpack.c.b16 %v732, %v731
        %v740 = vpack.c.b16 %v734, %v733
        %v741 = vpack.c.b16 %v736, %v735
        %v742 = vpack.c.b16 %v738, %v737
        %v751 = vunpack.c.l.b16 %v715
        %v752 = vunpack.c.l.b16 %v716
        %v753 = vunpack.c.l.b16 %v717
        %v754 = vunpack.c.l.b16 %v718
        %v755 = vunpack.c.l.b16 %v719
        %v756 = vunpack.c.l.b16 %v720
        %v757 = vunpack.c.l.b16 %v721
        %v758 = vunpack.c.l.b16 %v722
        %v759 = vpack.c.b16 %v752, %v751
        %v760 = vpack.c.b16 %v754, %v753
        %v761 = vpack.c.b16 %v756, %v755
        %v762 = vpack.c.b16 %v758, %v757
        %v768 = vsel %vm247, %v739, 0
        %v771 = vsel %vm247, %v740, 0
        %v774 = vsel %vm247, %v741, 0
        %v777 = vsel %vm247, %v742, 0
        %779 = vmatprep.subr.bf16.mxu0 0
        %780 = vmatpush1.bf16.msra.mxu0 %v759
        %781 = vmatprep.subr.bf16.mxu0 0
        %782 = vmatpush1.bf16.msra.mxu0 %v760
        %783 = vmatprep.subr.bf16.mxu0 0
        %784 = vmatpush1.bf16.msra.mxu0 %v761
        %785 = vmatprep.subr.bf16.mxu0 0
        %786 = vmatpush1.bf16.msra.mxu0 %v762
        %787 = vmatprep.subr.bf16.mxu0 0
        %788 = vmatpush1.bf16.msra.mxu0 0
        %789 = vmatprep.subr.bf16.mxu0 0
        %790 = vmatpush1.bf16.msra.mxu0 0
        %791 = vmatprep.subr.bf16.mxu0 0
        %792 = vmatpush1.bf16.msra.mxu0 0
        %793 = vmatprep.subr.bf16.mxu0 0
        %794 = vmatpush1.bf16.msra.mxu0 0
        %795 = vmatprep.subr.bf16.mxu0 0
        %796 = vmatpush1.bf16.msra.mxu0 0
        %797 = vmatprep.subr.bf16.mxu0 0
        %798 = vmatpush1.bf16.msra.mxu0 0
        %799 = vmatprep.subr.bf16.mxu0 0
        %800 = vmatpush1.bf16.msra.mxu0 0
        %801 = vmatprep.subr.bf16.mxu0 0
        %802 = vmatpush1.bf16.msra.mxu0 0
        %803 = vmatprep.subr.bf16.mxu0 0
        %804 = vmatpush1.bf16.msra.mxu0 0
        %805 = vmatprep.subr.bf16.mxu0 0
        %806 = vmatpush1.bf16.msra.mxu0 0
        %807 = vmatprep.subr.bf16.mxu0 0
        %808 = vmatpush1.bf16.msra.mxu0 0
        %809 = vmatprep.subr.bf16.mxu0 0
        %810 = vmatpush1.bf16.msra.mxu0 0
        %811 = vmatprep.mubr.bf16.mxu0 0
        %812 = vmatmul.mubr.bf16.gmra.mrb[0].mxu0 %v768
        %v813 = vpop.f32.mrb[0].mxu0
        %v814 = vadd.f32 0.0, %v813
        %v815 = vpop.f32.mrb[0].mxu0
        %v816 = vpop.f32.mrb[0].mxu0
        %v817 = vadd.f32 0.0, %v816
        %v818 = vpop.f32.mrb[0].mxu0
        %819 = vmatprep.mubr.bf16.mxu0 0
        %820 = vmatmul.mubr.bf16.gmra.mrb[0].mxu0 %v771
        %v821 = vpop.f32.mrb[0].mxu0
        %v822 = vadd.f32 0.0, %v821
        %v823 = vpop.f32.mrb[0].mxu0
        %v824 = vpop.f32.mrb[0].mxu0
        %v825 = vadd.f32 0.0, %v824
        %v826 = vpop.f32.mrb[0].mxu0
        %827 = vmatprep.mubr.bf16.mxu0 0
        %828 = vmatmul.mubr.bf16.gmra.mrb[0].mxu0 %v774
        %v829 = vpop.f32.mrb[0].mxu0
        %v830 = vadd.f32 0.0, %v829
        %v831 = vpop.f32.mrb[0].mxu0
        %v832 = vpop.f32.mrb[0].mxu0
        %v833 = vadd.f32 0.0, %v832
        %v834 = vpop.f32.mrb[0].mxu0
        %835 = vmatprep.mubr.bf16.mxu0 0
        %836 = vmatmul.mubr.bf16.gmra.mrb[0].mxu0 %v777
        %v837 = vpop.f32.mrb[0].mxu0
        %v838 = vadd.f32 0.0, %v837
        %v839 = vpop.f32.mrb[0].mxu0
        %v840 = vpop.f32.mrb[0].mxu0
        %v841 = vadd.f32 0.0, %v840
        %v842 = vpop.f32.mrb[0].mxu0
        %843 = vdwg.mxu0
        %v844 = vadd.f32 %v698, %v814
        %v845 = vadd.f32 %v699, %v817
        %v846 = vadd.f32 %v700, %v822
        %v847 = vadd.f32 %v701, %v825
        %v848 = vadd.f32 %v702, %v830
        %v849 = vadd.f32 %v703, %v833
        %v850 = vadd.f32 %v704, %v838
        %v851 = vadd.f32 %v705, %v841
        %s852 = scalar_lea.vmem %s168, 216
        %v853 = vld [vmem:[%s852] sm:$0xf]
        %v854 = vld [vmem:[%s852 + $0x8] sm:$0xf]
        %v855 = vld [vmem:[%s852 + $0x10] sm:$0xf]
        %v856 = vld [vmem:[%s852 + $0x18] sm:$0xf]
        %v857 = vld [vmem:[%s852 + $0x20] sm:$0xf]
        %v858 = vld [vmem:[%s852 + $0x28] sm:$0xf]
        %v859 = vld [vmem:[%s852 + $0x30] sm:$0xf]
        %v860 = vld [vmem:[%s852 + $0x38] sm:$0xf]
        %v861 = vld [vmem:[%s1 + $0x80] sm:$0xf]
        %v862 = vld [vmem:[%s1 + $0x84] sm:$0xf]
        %v863 = vld [vmem:[%s1 + $0x88] sm:$0xf]
        %v864 = vld [vmem:[%s1 + $0x8c] sm:$0xf]
        %v865 = vld [vmem:[%s1 + $0x90] sm:$0xf]
        %v866 = vld [vmem:[%s1 + $0x94] sm:$0xf]
        %v867 = vld [vmem:[%s1 + $0x98] sm:$0xf]
        %v868 = vld [vmem:[%s1 + $0x9c] sm:$0xf]
        %v877 = vunpack.c.l.b16 %v853
        %v878 = vunpack.c.l.b16 %v854
        %v879 = vunpack.c.l.b16 %v855
        %v880 = vunpack.c.l.b16 %v856
        %v881 = vunpack.c.l.b16 %v857
        %v882 = vunpack.c.l.b16 %v858
        %v883 = vunpack.c.l.b16 %v859
        %v884 = vunpack.c.l.b16 %v860
        %v885 = vpack.c.b16 %v878, %v877
        %v886 = vpack.c.b16 %v880, %v879
        %v887 = vpack.c.b16 %v882, %v881
        %v888 = vpack.c.b16 %v884, %v883
        %v897 = vunpack.c.l.b16 %v861
        %v898 = vunpack.c.l.b16 %v862
        %v899 = vunpack.c.l.b16 %v863
        %v900 = vunpack.c.l.b16 %v864
        %v901 = vunpack.c.l.b16 %v865
        %v902 = vunpack.c.l.b16 %v866
        %v903 = vunpack.c.l.b16 %v867
        %v904 = vunpack.c.l.b16 %v868
        %v905 = vpack.c.b16 %v898, %v897
        %v906 = vpack.c.b16 %v900, %v899
        %v907 = vpack.c.b16 %v902, %v901
        %v908 = vpack.c.b16 %v904, %v903
        %v914 = vsel %vm247, %v885, 0
        %v917 = vsel %vm247, %v886, 0
        %v920 = vsel %vm247, %v887, 0
        %v923 = vsel %vm247, %v888, 0
        %925 = vmatprep.subr.bf16.mxu0 0
        %926 = vmatpush1.bf16.msra.mxu0 %v905
        %927 = vmatprep.subr.bf16.mxu0 0
        %928 = vmatpush1.bf16.msra.mxu0 %v906
        %929 = vmatprep.subr.bf16.mxu0 0
        %930 = vmatpush1.bf16.msra.mxu0 %v907
        %931 = vmatprep.subr.bf16.mxu0 0
        %932 = vmatpush1.bf16.msra.mxu0 %v908
        %933 = vmatprep.subr.bf16.mxu0 0
        %934 = vmatpush1.bf16.msra.mxu0 0
        %935 = vmatprep.subr.bf16.mxu0 0
        %936 = vmatpush1.bf16.msra.mxu0 0
        %937 = vmatprep.subr.bf16.mxu0 0
        %938 = vmatpush1.bf16.msra.mxu0 0
        %939 = vmatprep.subr.bf16.mxu0 0
        %940 = vmatpush1.bf16.msra.mxu0 0
        %941 = vmatprep.subr.bf16.mxu0 0
        %942 = vmatpush1.bf16.msra.mxu0 0
        %943 = vmatprep.subr.bf16.mxu0 0
        %944 = vmatpush1.bf16.msra.mxu0 0
        %945 = vmatprep.subr.bf16.mxu0 0
        %946 = vmatpush1.bf16.msra.mxu0 0
        %947 = vmatprep.subr.bf16.mxu0 0
        %948 = vmatpush1.bf16.msra.mxu0 0
        %949 = vmatprep.subr.bf16.mxu0 0
        %950 = vmatpush1.bf16.msra.mxu0 0
        %951 = vmatprep.subr.bf16.mxu0 0
        %952 = vmatpush1.bf16.msra.mxu0 0
        %953 = vmatprep.subr.bf16.mxu0 0
        %954 = vmatpush1.bf16.msra.mxu0 0
        %955 = vmatprep.subr.bf16.mxu0 0
        %956 = vmatpush1.bf16.msra.mxu0 0
        %957 = vmatprep.mubr.bf16.mxu0 0
        %958 = vmatmul.mubr.bf16.gmra.mrb[0].mxu0 %v914
        %v959 = vpop.f32.mrb[0].mxu0
        %v960 = vadd.f32 0.0, %v959
        %v961 = vpop.f32.mrb[0].mxu0
        %v962 = vpop.f32.mrb[0].mxu0
        %v963 = vadd.f32 0.0, %v962
        %v964 = vpop.f32.mrb[0].mxu0
        %965 = vmatprep.mubr.bf16.mxu0 0
        %966 = vmatmul.mubr.bf16.gmra.mrb[0].mxu0 %v917
        %v967 = vpop.f32.mrb[0].mxu0
        %v968 = vadd.f32 0.0, %v967
        %v969 = vpop.f32.mrb[0].mxu0
        %v970 = vpop.f32.mrb[0].mxu0
        %v971 = vadd.f32 0.0, %v970
        %v972 = vpop.f32.mrb[0].mxu0
        %973 = vmatprep.mubr.bf16.mxu0 0
        %974 = vmatmul.mubr.bf16.gmra.mrb[0].mxu0 %v920
        %v975 = vpop.f32.mrb[0].mxu0
        %v976 = vadd.f32 0.0, %v975
        %v977 = vpop.f32.mrb[0].mxu0
        %v978 = vpop.f32.mrb[0].mxu0
        %v979 = vadd.f32 0.0, %v978
        %v980 = vpop.f32.mrb[0].mxu0
        %981 = vmatprep.mubr.bf16.mxu0 0
        %982 = vmatmul.mubr.bf16.gmra.mrb[0].mxu0 %v923
        %v983 = vpop.f32.mrb[0].mxu0
        %v984 = vadd.f32 0.0, %v983
        %v985 = vpop.f32.mrb[0].mxu0
        %v986 = vpop.f32.mrb[0].mxu0
        %v987 = vadd.f32 0.0, %v986
        %v988 = vpop.f32.mrb[0].mxu0
        %989 = vdwg.mxu0
        %v990 = vadd.f32 %v844, %v960
        %v991 = vadd.f32 %v845, %v963
        %v992 = vadd.f32 %v846, %v968
        %v993 = vadd.f32 %v847, %v971
        %v994 = vadd.f32 %v848, %v976
        %v995 = vadd.f32 %v849, %v979
        %v996 = vadd.f32 %v850, %v984
        %v997 = vadd.f32 %v851, %v987
        %v998 = vld [vmem:[%s706] sm:$0xf]
        %v999 = vld [vmem:[%s706 + $0x4] sm:$0x1]
        %v1000 = vld [vmem:[%s706 + $0x8] sm:$0xf]
        %v1001 = vld [vmem:[%s706 + $0xc] sm:$0x1]
        %v1002 = vld [vmem:[%s706 + $0x10] sm:$0xf]
        %v1003 = vld [vmem:[%s706 + $0x14] sm:$0x1]
        %v1004 = vld [vmem:[%s706 + $0x18] sm:$0xf]
        %v1005 = vld [vmem:[%s706 + $0x1c] sm:$0x1]
        %v1006 = vld [vmem:[%s706 + $0x20] sm:$0xf]
        %v1007 = vld [vmem:[%s706 + $0x24] sm:$0x1]
        %v1008 = vld [vmem:[%s706 + $0x28] sm:$0xf]
        %v1009 = vld [vmem:[%s706 + $0x2c] sm:$0x1]
        %v1010 = vld [vmem:[%s706 + $0x30] sm:$0xf]
        %v1011 = vld [vmem:[%s706 + $0x34] sm:$0x1]
        %v1012 = vld [vmem:[%s706 + $0x38] sm:$0xf]
        %v1013 = vld [vmem:[%s706 + $0x3c] sm:$0x1]
        %v1015 = vshrl.u32 %v998, 16
        %v1017 = vrot.slane %v1015, 4
        %v1018 = vshll.u32 %v998, 16
        %v1020 = vrot.slane %v1018, 5
        %v1021 = vor.u32 %v1017, %v1020
        %v1022 = vrot.slane %v1021, 4
        %v1024 = vshll.u32 %v999, 16
        %v1026 = vrot.slane %v1024, 5
        %v1027 = vsel %vm464, %v1022, %v1026
        %v1029 = vshrl.u32 %v1000, 16
        %v1031 = vrot.slane %v1029, 4
        %v1032 = vshll.u32 %v1000, 16
        %v1034 = vrot.slane %v1032, 5
        %v1035 = vor.u32 %v1031, %v1034
        %v1036 = vrot.slane %v1035, 4
        %v1038 = vshll.u32 %v1001, 16
        %v1040 = vrot.slane %v1038, 5
        %v1041 = vsel %vm464, %v1036, %v1040
        %v1043 = vshrl.u32 %v1002, 16
        %v1045 = vrot.slane %v1043, 4
        %v1046 = vshll.u32 %v1002, 16
        %v1048 = vrot.slane %v1046, 5
        %v1049 = vor.u32 %v1045, %v1048
        %v1050 = vrot.slane %v1049, 4
        %v1052 = vshll.u32 %v1003, 16
        %v1054 = vrot.slane %v1052, 5
        %v1055 = vsel %vm464, %v1050, %v1054
        %v1057 = vshrl.u32 %v1004, 16
        %v1059 = vrot.slane %v1057, 4
        %v1060 = vshll.u32 %v1004, 16
        %v1062 = vrot.slane %v1060, 5
        %v1063 = vor.u32 %v1059, %v1062
        %v1064 = vrot.slane %v1063, 4
        %v1066 = vshll.u32 %v1005, 16
        %v1068 = vrot.slane %v1066, 5
        %v1069 = vsel %vm464, %v1064, %v1068
        %v1071 = vshrl.u32 %v1006, 16
        %v1073 = vrot.slane %v1071, 4
        %v1074 = vshll.u32 %v1006, 16
        %v1076 = vrot.slane %v1074, 5
        %v1077 = vor.u32 %v1073, %v1076
        %v1078 = vrot.slane %v1077, 4
        %v1080 = vshll.u32 %v1007, 16
        %v1082 = vrot.slane %v1080, 5
        %v1083 = vsel %vm464, %v1078, %v1082
        %v1085 = vshrl.u32 %v1008, 16
        %v1087 = vrot.slane %v1085, 4
        %v1088 = vshll.u32 %v1008, 16
        %v1090 = vrot.slane %v1088, 5
        %v1091 = vor.u32 %v1087, %v1090
        %v1092 = vrot.slane %v1091, 4
        %v1094 = vshll.u32 %v1009, 16
        %v1096 = vrot.slane %v1094, 5
        %v1097 = vsel %vm464, %v1092, %v1096
        %v1099 = vshrl.u32 %v1010, 16
        %v1101 = vrot.slane %v1099, 4
        %v1102 = vshll.u32 %v1010, 16
        %v1104 = vrot.slane %v1102, 5
        %v1105 = vor.u32 %v1101, %v1104
        %v1106 = vrot.slane %v1105, 4
        %v1108 = vshll.u32 %v1011, 16
        %v1110 = vrot.slane %v1108, 5
        %v1111 = vsel %vm464, %v1106, %v1110
        %v1113 = vshrl.u32 %v1012, 16
        %v1115 = vrot.slane %v1113, 4
        %v1116 = vshll.u32 %v1012, 16
        %v1118 = vrot.slane %v1116, 5
        %v1119 = vor.u32 %v1115, %v1118
        %v1120 = vrot.slane %v1119, 4
        %v1122 = vshll.u32 %v1013, 16
        %v1124 = vrot.slane %v1122, 5
        %v1125 = vsel %vm464, %v1120, %v1124
        %v1126 = vld [vmem:[%s1 + $0xa0] sm:$0xf]
        %v1127 = vld [vmem:[%s1 + $0xa4] sm:$0xf]
        %v1128 = vld [vmem:[%s1 + $0xa8] sm:$0xf]
        %v1129 = vld [vmem:[%s1 + $0xac] sm:$0xf]
        %v1130 = vld [vmem:[%s1 + $0xb0] sm:$0xf]
        %v1131 = vld [vmem:[%s1 + $0xb4] sm:$0xf]
        %v1132 = vld [vmem:[%s1 + $0xb8] sm:$0xf]
        %v1133 = vld [vmem:[%s1 + $0xbc] sm:$0xf]
        %v1134 = vunpack.c.l.b16 %v1027
        %v1135 = vunpack.c.l.b16 %v1041
        %v1136 = vunpack.c.l.b16 %v1055
        %v1137 = vunpack.c.l.b16 %v1069
        %v1138 = vunpack.c.l.b16 %v1083
        %v1139 = vunpack.c.l.b16 %v1097
        %v1140 = vunpack.c.l.b16 %v1111
        %v1141 = vunpack.c.l.b16 %v1125
        %v1142 = vpack.c.b16 %v1135, %v1134
        %v1143 = vpack.c.b16 %v1137, %v1136
        %v1144 = vpack.c.b16 %v1139, %v1138
        %v1145 = vpack.c.b16 %v1141, %v1140
        %v1154 = vunpack.c.l.b16 %v1126
        %v1155 = vunpack.c.l.b16 %v1127
        %v1156 = vunpack.c.l.b16 %v1128
        %v1157 = vunpack.c.l.b16 %v1129
        %v1158 = vunpack.c.l.b16 %v1130
        %v1159 = vunpack.c.l.b16 %v1131
        %v1160 = vunpack.c.l.b16 %v1132
        %v1161 = vunpack.c.l.b16 %v1133
        %v1162 = vpack.c.b16 %v1155, %v1154
        %v1163 = vpack.c.b16 %v1157, %v1156
        %v1164 = vpack.c.b16 %v1159, %v1158
        %v1165 = vpack.c.b16 %v1161, %v1160
        %v1171 = vsel %vm247, %v1142, 0
        %v1174 = vsel %vm247, %v1143, 0
        %v1177 = vsel %vm247, %v1144, 0
        %v1180 = vsel %vm247, %v1145, 0
        %1182 = vmatprep.subr.bf16.mxu0 0
        %1183 = vmatpush1.bf16.msra.mxu0 %v1162
        %1184 = vmatprep.subr.bf16.mxu0 0
        %1185 = vmatpush1.bf16.msra.mxu0 %v1163
        %1186 = vmatprep.subr.bf16.mxu0 0
        %1187 = vmatpush1.bf16.msra.mxu0 %v1164
        %1188 = vmatprep.subr.bf16.mxu0 0
        %1189 = vmatpush1.bf16.msra.mxu0 %v1165
        %1190 = vmatprep.subr.bf16.mxu0 0
        %1191 = vmatpush1.bf16.msra.mxu0 0
        %1192 = vmatprep.subr.bf16.mxu0 0
        %1193 = vmatpush1.bf16.msra.mxu0 0
        %1194 = vmatprep.subr.bf16.mxu0 0
        %1195 = vmatpush1.bf16.msra.mxu0 0
        %1196 = vmatprep.subr.bf16.mxu0 0
        %1197 = vmatpush1.bf16.msra.mxu0 0
        %1198 = vmatprep.subr.bf16.mxu0 0
        %1199 = vmatpush1.bf16.msra.mxu0 0
        %1200 = vmatprep.subr.bf16.mxu0 0
        %1201 = vmatpush1.bf16.msra.mxu0 0
        %1202 = vmatprep.subr.bf16.mxu0 0
        %1203 = vmatpush1.bf16.msra.mxu0 0
        %1204 = vmatprep.subr.bf16.mxu0 0
        %1205 = vmatpush1.bf16.msra.mxu0 0
        %1206 = vmatprep.subr.bf16.mxu0 0
        %1207 = vmatpush1.bf16.msra.mxu0 0
        %1208 = vmatprep.subr.bf16.mxu0 0
        %1209 = vmatpush1.bf16.msra.mxu0 0
        %1210 = vmatprep.subr.bf16.mxu0 0
        %1211 = vmatpush1.bf16.msra.mxu0 0
        %1212 = vmatprep.subr.bf16.mxu0 0
        %1213 = vmatpush1.bf16.msra.mxu0 0
        %1214 = vmatprep.mubr.bf16.mxu0 0
        %1215 = vmatmul.mubr.bf16.gmra.mrb[0].mxu0 %v1171
        %v1216 = vpop.f32.mrb[0].mxu0
        %v1217 = vadd.f32 0.0, %v1216
        %v1218 = vpop.f32.mrb[0].mxu0
        %v1219 = vpop.f32.mrb[0].mxu0
        %v1220 = vadd.f32 0.0, %v1219
        %v1221 = vpop.f32.mrb[0].mxu0
        %1222 = vmatprep.mubr.bf16.mxu0 0
        %1223 = vmatmul.mubr.bf16.gmra.mrb[0].mxu0 %v1174
        %v1224 = vpop.f32.mrb[0].mxu0
        %v1225 = vadd.f32 0.0, %v1224
        %v1226 = vpop.f32.mrb[0].mxu0
        %v1227 = vpop.f32.mrb[0].mxu0
        %v1228 = vadd.f32 0.0, %v1227
        %v1229 = vpop.f32.mrb[0].mxu0
        %1230 = vmatprep.mubr.bf16.mxu0 0
        %1231 = vmatmul.mubr.bf16.gmra.mrb[0].mxu0 %v1177
        %v1232 = vpop.f32.mrb[0].mxu0
        %v1233 = vadd.f32 0.0, %v1232
        %v1234 = vpop.f32.mrb[0].mxu0
        %v1235 = vpop.f32.mrb[0].mxu0
        %v1236 = vadd.f32 0.0, %v1235
        %v1237 = vpop.f32.mrb[0].mxu0
        %1238 = vmatprep.mubr.bf16.mxu0 0
        %1239 = vmatmul.mubr.bf16.gmra.mrb[0].mxu0 %v1180
        %v1240 = vpop.f32.mrb[0].mxu0
        %v1241 = vadd.f32 0.0, %v1240
        %v1242 = vpop.f32.mrb[0].mxu0
        %v1243 = vpop.f32.mrb[0].mxu0
        %v1244 = vadd.f32 0.0, %v1243
        %v1245 = vpop.f32.mrb[0].mxu0
        %1246 = vdwg.mxu0
        %v1247 = vadd.f32 %v990, %v1217
        %v1248 = vadd.f32 %v991, %v1220
        %v1249 = vadd.f32 %v992, %v1225
        %v1250 = vadd.f32 %v993, %v1228
        %v1251 = vadd.f32 %v994, %v1233
        %v1252 = vadd.f32 %v995, %v1236
        %v1253 = vadd.f32 %v996, %v1241
        %v1254 = vadd.f32 %v997, %v1244
        %s1255 = scalar_lea.vmem %s168, 8
        %v1256 = vld [vmem:[%s1255] sm:$0xf]
        %v1257 = vld [vmem:[%s1255 + $0x8] sm:$0xf]
        %v1258 = vld [vmem:[%s1255 + $0x10] sm:$0xf]
        %v1259 = vld [vmem:[%s1255 + $0x18] sm:$0xf]
        %v1260 = vld [vmem:[%s1255 + $0x20] sm:$0xf]
        %v1261 = vld [vmem:[%s1255 + $0x28] sm:$0xf]
        %v1262 = vld [vmem:[%s1255 + $0x30] sm:$0xf]
        %v1263 = vld [vmem:[%s1255 + $0x38] sm:$0xf]
        %v1264 = vld [vmem:[%s1 + $0xc0] sm:$0xf]
        %v1265 = vld [vmem:[%s1 + $0xc4] sm:$0xf]
        %v1266 = vld [vmem:[%s1 + $0xc8] sm:$0xf]
        %v1267 = vld [vmem:[%s1 + $0xcc] sm:$0xf]
        %v1268 = vld [vmem:[%s1 + $0xd0] sm:$0xf]
        %v1269 = vld [vmem:[%s1 + $0xd4] sm:$0xf]
        %v1270 = vld [vmem:[%s1 + $0xd8] sm:$0xf]
        %v1271 = vld [vmem:[%s1 + $0xdc] sm:$0xf]
        %v1280 = vunpack.c.l.b16 %v1256
        %v1281 = vunpack.c.l.b16 %v1257
        %v1282 = vunpack.c.l.b16 %v1258
        %v1283 = vunpack.c.l.b16 %v1259
        %v1284 = vunpack.c.l.b16 %v1260
        %v1285 = vunpack.c.l.b16 %v1261
        %v1286 = vunpack.c.l.b16 %v1262
        %v1287 = vunpack.c.l.b16 %v1263
        %v1288 = vpack.c.b16 %v1281, %v1280
        %v1289 = vpack.c.b16 %v1283, %v1282
        %v1290 = vpack.c.b16 %v1285, %v1284
        %v1291 = vpack.c.b16 %v1287, %v1286
        %v1300 = vunpack.c.l.b16 %v1264
        %v1301 = vunpack.c.l.b16 %v1265
        %v1302 = vunpack.c.l.b16 %v1266
        %v1303 = vunpack.c.l.b16 %v1267
        %v1304 = vunpack.c.l.b16 %v1268
        %v1305 = vunpack.c.l.b16 %v1269
        %v1306 = vunpack.c.l.b16 %v1270
        %v1307 = vunpack.c.l.b16 %v1271
        %v1308 = vpack.c.b16 %v1301, %v1300
        %v1309 = vpack.c.b16 %v1303, %v1302
        %v1310 = vpack.c.b16 %v1305, %v1304
        %v1311 = vpack.c.b16 %v1307, %v1306
        %v1317 = vsel %vm247, %v1288, 0
        %v1320 = vsel %vm247, %v1289, 0
        %v1323 = vsel %vm247, %v1290, 0
        %v1326 = vsel %vm247, %v1291, 0
        %1328 = vmatprep.subr.bf16.mxu0 0
        %1329 = vmatpush1.bf16.msra.mxu0 %v1308
        %1330 = vmatprep.subr.bf16.mxu0 0
        %1331 = vmatpush1.bf16.msra.mxu0 %v1309
        %1332 = vmatprep.subr.bf16.mxu0 0
        %1333 = vmatpush1.bf16.msra.mxu0 %v1310
        %1334 = vmatprep.subr.bf16.mxu0 0
        %1335 = vmatpush1.bf16.msra.mxu0 %v1311
        %1336 = vmatprep.subr.bf16.mxu0 0
        %1337 = vmatpush1.bf16.msra.mxu0 0
        %1338 = vmatprep.subr.bf16.mxu0 0
        %1339 = vmatpush1.bf16.msra.mxu0 0
        %1340 = vmatprep.subr.bf16.mxu0 0
        %1341 = vmatpush1.bf16.msra.mxu0 0
        %1342 = vmatprep.subr.bf16.mxu0 0
        %1343 = vmatpush1.bf16.msra.mxu0 0
        %1344 = vmatprep.subr.bf16.mxu0 0
        %1345 = vmatpush1.bf16.msra.mxu0 0
        %1346 = vmatprep.subr.bf16.mxu0 0
        %1347 = vmatpush1.bf16.msra.mxu0 0
        %1348 = vmatprep.subr.bf16.mxu0 0
        %1349 = vmatpush1.bf16.msra.mxu0 0
        %1350 = vmatprep.subr.bf16.mxu0 0
        %1351 = vmatpush1.bf16.msra.mxu0 0
        %1352 = vmatprep.subr.bf16.mxu0 0
        %1353 = vmatpush1.bf16.msra.mxu0 0
        %1354 = vmatprep.subr.bf16.mxu0 0
        %1355 = vmatpush1.bf16.msra.mxu0 0
        %1356 = vmatprep.subr.bf16.mxu0 0
        %1357 = vmatpush1.bf16.msra.mxu0 0
        %1358 = vmatprep.subr.bf16.mxu0 0
        %1359 = vmatpush1.bf16.msra.mxu0 0
        %1360 = vmatprep.mubr.bf16.mxu0 0
        %1361 = vmatmul.mubr.bf16.gmra.mrb[0].mxu0 %v1317
        %v1362 = vpop.f32.mrb[0].mxu0
        %v1363 = vadd.f32 0.0, %v1362
        %v1364 = vpop.f32.mrb[0].mxu0
        %v1365 = vpop.f32.mrb[0].mxu0
        %v1366 = vadd.f32 0.0, %v1365
        %v1367 = vpop.f32.mrb[0].mxu0
        %1368 = vmatprep.mubr.bf16.mxu0 0
        %1369 = vmatmul.mubr.bf16.gmra.mrb[0].mxu0 %v1320
        %v1370 = vpop.f32.mrb[0].mxu0
        %v1371 = vadd.f32 0.0, %v1370
        %v1372 = vpop.f32.mrb[0].mxu0
        %v1373 = vpop.f32.mrb[0].mxu0
        %v1374 = vadd.f32 0.0, %v1373
        %v1375 = vpop.f32.mrb[0].mxu0
        %1376 = vmatprep.mubr.bf16.mxu0 0
        %1377 = vmatmul.mubr.bf16.gmra.mrb[0].mxu0 %v1323
        %v1378 = vpop.f32.mrb[0].mxu0
        %v1379 = vadd.f32 0.0, %v1378
        %v1380 = vpop.f32.mrb[0].mxu0
        %v1381 = vpop.f32.mrb[0].mxu0
        %v1382 = vadd.f32 0.0, %v1381
        %v1383 = vpop.f32.mrb[0].mxu0
        %1384 = vmatprep.mubr.bf16.mxu0 0
        %1385 = vmatmul.mubr.bf16.gmra.mrb[0].mxu0 %v1326
        %v1386 = vpop.f32.mrb[0].mxu0
        %v1387 = vadd.f32 0.0, %v1386
        %v1388 = vpop.f32.mrb[0].mxu0
        %v1389 = vpop.f32.mrb[0].mxu0
        %v1390 = vadd.f32 0.0, %v1389
        %v1391 = vpop.f32.mrb[0].mxu0
        %1392 = vdwg.mxu0
        %v1393 = vadd.f32 %v1247, %v1363
        %v1394 = vadd.f32 %v1248, %v1366
        %v1395 = vadd.f32 %v1249, %v1371
        %v1396 = vadd.f32 %v1250, %v1374
        %v1397 = vadd.f32 %v1251, %v1379
        %v1398 = vadd.f32 %v1252, %v1382
        %v1399 = vadd.f32 %v1253, %v1387
        %v1400 = vadd.f32 %v1254, %v1390
        %s1401 = scalar_lea.vmem %s168, 80
        %v1402 = vld [vmem:[%s1401] sm:$0xf]
        %v1403 = vld [vmem:[%s1401 + $0x8] sm:$0xf]
        %v1404 = vld [vmem:[%s1401 + $0x10] sm:$0xf]
        %v1405 = vld [vmem:[%s1401 + $0x18] sm:$0xf]
        %v1406 = vld [vmem:[%s1401 + $0x20] sm:$0xf]
        %v1407 = vld [vmem:[%s1401 + $0x28] sm:$0xf]
        %v1408 = vld [vmem:[%s1401 + $0x30] sm:$0xf]
        %v1409 = vld [vmem:[%s1401 + $0x38] sm:$0xf]
        %v1410 = vld [vmem:[%s1 + $0xe0] sm:$0xf]
        %v1411 = vld [vmem:[%s1 + $0xe4] sm:$0xf]
        %v1412 = vld [vmem:[%s1 + $0xe8] sm:$0xf]
        %v1413 = vld [vmem:[%s1 + $0xec] sm:$0xf]
        %v1414 = vld [vmem:[%s1 + $0xf0] sm:$0xf]
        %v1415 = vld [vmem:[%s1 + $0xf4] sm:$0xf]
        %v1416 = vld [vmem:[%s1 + $0xf8] sm:$0xf]
        %v1417 = vld [vmem:[%s1 + $0xfc] sm:$0xf]
        %v1426 = vunpack.c.l.b16 %v1402
        %v1427 = vunpack.c.l.b16 %v1403
        %v1428 = vunpack.c.l.b16 %v1404
        %v1429 = vunpack.c.l.b16 %v1405
        %v1430 = vunpack.c.l.b16 %v1406
        %v1431 = vunpack.c.l.b16 %v1407
        %v1432 = vunpack.c.l.b16 %v1408
        %v1433 = vunpack.c.l.b16 %v1409
        %v1434 = vpack.c.b16 %v1427, %v1426
        %v1435 = vpack.c.b16 %v1429, %v1428
        %v1436 = vpack.c.b16 %v1431, %v1430
        %v1437 = vpack.c.b16 %v1433, %v1432
        %v1446 = vunpack.c.l.b16 %v1410
        %v1447 = vunpack.c.l.b16 %v1411
        %v1448 = vunpack.c.l.b16 %v1412
        %v1449 = vunpack.c.l.b16 %v1413
        %v1450 = vunpack.c.l.b16 %v1414
        %v1451 = vunpack.c.l.b16 %v1415
        %v1452 = vunpack.c.l.b16 %v1416
        %v1453 = vunpack.c.l.b16 %v1417
        %v1454 = vpack.c.b16 %v1447, %v1446
        %v1455 = vpack.c.b16 %v1449, %v1448
        %v1456 = vpack.c.b16 %v1451, %v1450
        %v1457 = vpack.c.b16 %v1453, %v1452
        %v1463 = vsel %vm247, %v1434, 0
        %v1466 = vsel %vm247, %v1435, 0
        %v1469 = vsel %vm247, %v1436, 0
        %v1472 = vsel %vm247, %v1437, 0
        %1474 = vmatprep.subr.bf16.mxu0 0
        %1475 = vmatpush1.bf16.msra.mxu0 %v1454
        %1476 = vmatprep.subr.bf16.mxu0 0
        %1477 = vmatpush1.bf16.msra.mxu0 %v1455
        %1478 = vmatprep.subr.bf16.mxu0 0
        %1479 = vmatpush1.bf16.msra.mxu0 %v1456
        %1480 = vmatprep.subr.bf16.mxu0 0
        %1481 = vmatpush1.bf16.msra.mxu0 %v1457
        %1482 = vmatprep.subr.bf16.mxu0 0
        %1483 = vmatpush1.bf16.msra.mxu0 0
        %1484 = vmatprep.subr.bf16.mxu0 0
        %1485 = vmatpush1.bf16.msra.mxu0 0
        %1486 = vmatprep.subr.bf16.mxu0 0
        %1487 = vmatpush1.bf16.msra.mxu0 0
        %1488 = vmatprep.subr.bf16.mxu0 0
        %1489 = vmatpush1.bf16.msra.mxu0 0
        %1490 = vmatprep.subr.bf16.mxu0 0
        %1491 = vmatpush1.bf16.msra.mxu0 0
        %1492 = vmatprep.subr.bf16.mxu0 0
        %1493 = vmatpush1.bf16.msra.mxu0 0
        %1494 = vmatprep.subr.bf16.mxu0 0
        %1495 = vmatpush1.bf16.msra.mxu0 0
        %1496 = vmatprep.subr.bf16.mxu0 0
        %1497 = vmatpush1.bf16.msra.mxu0 0
        %1498 = vmatprep.subr.bf16.mxu0 0
        %1499 = vmatpush1.bf16.msra.mxu0 0
        %1500 = vmatprep.subr.bf16.mxu0 0
        %1501 = vmatpush1.bf16.msra.mxu0 0
        %1502 = vmatprep.subr.bf16.mxu0 0
        %1503 = vmatpush1.bf16.msra.mxu0 0
        %1504 = vmatprep.subr.bf16.mxu0 0
        %1505 = vmatpush1.bf16.msra.mxu0 0
        %1506 = vmatprep.mubr.bf16.mxu0 0
        %1507 = vmatmul.mubr.bf16.gmra.mrb[0].mxu0 %v1463
        %v1508 = vpop.f32.mrb[0].mxu0
        %v1509 = vadd.f32 0.0, %v1508
        %v1510 = vpop.f32.mrb[0].mxu0
        %v1511 = vpop.f32.mrb[0].mxu0
        %v1512 = vadd.f32 0.0, %v1511
        %v1513 = vpop.f32.mrb[0].mxu0
        %1514 = vmatprep.mubr.bf16.mxu0 0
        %1515 = vmatmul.mubr.bf16.gmra.mrb[0].mxu0 %v1466
        %v1516 = vpop.f32.mrb[0].mxu0
        %v1517 = vadd.f32 0.0, %v1516
        %v1518 = vpop.f32.mrb[0].mxu0
        %v1519 = vpop.f32.mrb[0].mxu0
        %v1520 = vadd.f32 0.0, %v1519
        %v1521 = vpop.f32.mrb[0].mxu0
        %1522 = vmatprep.mubr.bf16.mxu0 0
        %1523 = vmatmul.mubr.bf16.gmra.mrb[0].mxu0 %v1469
        %v1524 = vpop.f32.mrb[0].mxu0
        %v1525 = vadd.f32 0.0, %v1524
        %v1526 = vpop.f32.mrb[0].mxu0
        %v1527 = vpop.f32.mrb[0].mxu0
        %v1528 = vadd.f32 0.0, %v1527
        %v1529 = vpop.f32.mrb[0].mxu0
        %1530 = vmatprep.mubr.bf16.mxu0 0
        %1531 = vmatmul.mubr.bf16.gmra.mrb[0].mxu0 %v1472
        %v1532 = vpop.f32.mrb[0].mxu0
        %v1533 = vadd.f32 0.0, %v1532
        %v1534 = vpop.f32.mrb[0].mxu0
        %v1535 = vpop.f32.mrb[0].mxu0
        %v1536 = vadd.f32 0.0, %v1535
        %v1537 = vpop.f32.mrb[0].mxu0
        %1538 = vdwg.mxu0
        %v1539 = vadd.f32 %v1393, %v1509
        %v1540 = vadd.f32 %v1394, %v1512
        %v1541 = vadd.f32 %v1395, %v1517
        %v1542 = vadd.f32 %v1396, %v1520
        %v1543 = vadd.f32 %v1397, %v1525
        %v1544 = vadd.f32 %v1398, %v1528
        %v1545 = vadd.f32 %v1399, %v1533
        %v1546 = vadd.f32 %v1400, %v1536
        %v1547 = vld [vmem:[%s1255] sm:$0xf]
        %v1548 = vld [vmem:[%s1255 + $0x4] sm:$0x1]
        %v1549 = vld [vmem:[%s1255 + $0x8] sm:$0xf]
        %v1550 = vld [vmem:[%s1255 + $0xc] sm:$0x1]
        %v1551 = vld [vmem:[%s1255 + $0x10] sm:$0xf]
        %v1552 = vld [vmem:[%s1255 + $0x14] sm:$0x1]
        %v1553 = vld [vmem:[%s1255 + $0x18] sm:$0xf]
        %v1554 = vld [vmem:[%s1255 + $0x1c] sm:$0x1]
        %v1555 = vld [vmem:[%s1255 + $0x20] sm:$0xf]
        %v1556 = vld [vmem:[%s1255 + $0x24] sm:$0x1]
        %v1557 = vld [vmem:[%s1255 + $0x28] sm:$0xf]
        %v1558 = vld [vmem:[%s1255 + $0x2c] sm:$0x1]
        %v1559 = vld [vmem:[%s1255 + $0x30] sm:$0xf]
        %v1560 = vld [vmem:[%s1255 + $0x34] sm:$0x1]
        %v1561 = vld [vmem:[%s1255 + $0x38] sm:$0xf]
        %v1562 = vld [vmem:[%s1255 + $0x3c] sm:$0x1]
        %v1564 = vshrl.u32 %v1547, 16
        %v1566 = vrot.slane %v1564, 4
        %v1567 = vshll.u32 %v1547, 16
        %v1569 = vrot.slane %v1567, 5
        %v1570 = vor.u32 %v1566, %v1569
        %v1571 = vrot.slane %v1570, 4
        %v1573 = vshll.u32 %v1548, 16
        %v1575 = vrot.slane %v1573, 5
        %v1576 = vsel %vm464, %v1571, %v1575
        %v1578 = vshrl.u32 %v1549, 16
        %v1580 = vrot.slane %v1578, 4
        %v1581 = vshll.u32 %v1549, 16
        %v1583 = vrot.slane %v1581, 5
        %v1584 = vor.u32 %v1580, %v1583
        %v1585 = vrot.slane %v1584, 4
        %v1587 = vshll.u32 %v1550, 16
        %v1589 = vrot.slane %v1587, 5
        %v1590 = vsel %vm464, %v1585, %v1589
        %v1592 = vshrl.u32 %v1551, 16
        %v1594 = vrot.slane %v1592, 4
        %v1595 = vshll.u32 %v1551, 16
        %v1597 = vrot.slane %v1595, 5
        %v1598 = vor.u32 %v1594, %v1597
        %v1599 = vrot.slane %v1598, 4
        %v1601 = vshll.u32 %v1552, 16
        %v1603 = vrot.slane %v1601, 5
        %v1604 = vsel %vm464, %v1599, %v1603
        %v1606 = vshrl.u32 %v1553, 16
        %v1608 = vrot.slane %v1606, 4
        %v1609 = vshll.u32 %v1553, 16
        %v1611 = vrot.slane %v1609, 5
        %v1612 = vor.u32 %v1608, %v1611
        %v1613 = vrot.slane %v1612, 4
        %v1615 = vshll.u32 %v1554, 16
        %v1617 = vrot.slane %v1615, 5
        %v1618 = vsel %vm464, %v1613, %v1617
        %v1620 = vshrl.u32 %v1555, 16
        %v1622 = vrot.slane %v1620, 4
        %v1623 = vshll.u32 %v1555, 16
        %v1625 = vrot.slane %v1623, 5
        %v1626 = vor.u32 %v1622, %v1625
        %v1627 = vrot.slane %v1626, 4
        %v1629 = vshll.u32 %v1556, 16
        %v1631 = vrot.slane %v1629, 5
        %v1632 = vsel %vm464, %v1627, %v1631
        %v1634 = vshrl.u32 %v1557, 16
        %v1636 = vrot.slane %v1634, 4
        %v1637 = vshll.u32 %v1557, 16
        %v1639 = vrot.slane %v1637, 5
        %v1640 = vor.u32 %v1636, %v1639
        %v1641 = vrot.slane %v1640, 4
        %v1643 = vshll.u32 %v1558, 16
        %v1645 = vrot.slane %v1643, 5
        %v1646 = vsel %vm464, %v1641, %v1645
        %v1648 = vshrl.u32 %v1559, 16
        %v1650 = vrot.slane %v1648, 4
        %v1651 = vshll.u32 %v1559, 16
        %v1653 = vrot.slane %v1651, 5
        %v1654 = vor.u32 %v1650, %v1653
        %v1655 = vrot.slane %v1654, 4
        %v1657 = vshll.u32 %v1560, 16
        %v1659 = vrot.slane %v1657, 5
        %v1660 = vsel %vm464, %v1655, %v1659
        %v1662 = vshrl.u32 %v1561, 16
        %v1664 = vrot.slane %v1662, 4
        %v1665 = vshll.u32 %v1561, 16
        %v1667 = vrot.slane %v1665, 5
        %v1668 = vor.u32 %v1664, %v1667
        %v1669 = vrot.slane %v1668, 4
        %v1671 = vshll.u32 %v1562, 16
        %v1673 = vrot.slane %v1671, 5
        %v1674 = vsel %vm464, %v1669, %v1673
        %v1675 = vld [vmem:[%s1 + $0x100] sm:$0xf]
        %v1676 = vld [vmem:[%s1 + $0x104] sm:$0xf]
        %v1677 = vld [vmem:[%s1 + $0x108] sm:$0xf]
        %v1678 = vld [vmem:[%s1 + $0x10c] sm:$0xf]
        %v1679 = vld [vmem:[%s1 + $0x110] sm:$0xf]
        %v1680 = vld [vmem:[%s1 + $0x114] sm:$0xf]
        %v1681 = vld [vmem:[%s1 + $0x118] sm:$0xf]
        %v1682 = vld [vmem:[%s1 + $0x11c] sm:$0xf]
        %v1683 = vunpack.c.l.b16 %v1576
        %v1684 = vunpack.c.l.b16 %v1590
        %v1685 = vunpack.c.l.b16 %v1604
        %v1686 = vunpack.c.l.b16 %v1618
        %v1687 = vunpack.c.l.b16 %v1632
        %v1688 = vunpack.c.l.b16 %v1646
        %v1689 = vunpack.c.l.b16 %v1660
        %v1690 = vunpack.c.l.b16 %v1674
        %v1691 = vpack.c.b16 %v1684, %v1683
        %v1692 = vpack.c.b16 %v1686, %v1685
        %v1693 = vpack.c.b16 %v1688, %v1687
        %v1694 = vpack.c.b16 %v1690, %v1689
        %v1703 = vunpack.c.l.b16 %v1675
        %v1704 = vunpack.c.l.b16 %v1676
        %v1705 = vunpack.c.l.b16 %v1677
        %v1706 = vunpack.c.l.b16 %v1678
        %v1707 = vunpack.c.l.b16 %v1679
        %v1708 = vunpack.c.l.b16 %v1680
        %v1709 = vunpack.c.l.b16 %v1681
        %v1710 = vunpack.c.l.b16 %v1682
        %v1711 = vpack.c.b16 %v1704, %v1703
        %v1712 = vpack.c.b16 %v1706, %v1705
        %v1713 = vpack.c.b16 %v1708, %v1707
        %v1714 = vpack.c.b16 %v1710, %v1709
        %v1720 = vsel %vm247, %v1691, 0
        %v1723 = vsel %vm247, %v1692, 0
        %v1726 = vsel %vm247, %v1693, 0
        %v1729 = vsel %vm247, %v1694, 0
        %1731 = vmatprep.subr.bf16.mxu0 0
        %1732 = vmatpush1.bf16.msra.mxu0 %v1711
        %1733 = vmatprep.subr.bf16.mxu0 0
        %1734 = vmatpush1.bf16.msra.mxu0 %v1712
        %1735 = vmatprep.subr.bf16.mxu0 0
        %1736 = vmatpush1.bf16.msra.mxu0 %v1713
        %1737 = vmatprep.subr.bf16.mxu0 0
        %1738 = vmatpush1.bf16.msra.mxu0 %v1714
        %1739 = vmatprep.subr.bf16.mxu0 0
        %1740 = vmatpush1.bf16.msra.mxu0 0
        %1741 = vmatprep.subr.bf16.mxu0 0
        %1742 = vmatpush1.bf16.msra.mxu0 0
        %1743 = vmatprep.subr.bf16.mxu0 0
        %1744 = vmatpush1.bf16.msra.mxu0 0
        %1745 = vmatprep.subr.bf16.mxu0 0
        %1746 = vmatpush1.bf16.msra.mxu0 0
        %1747 = vmatprep.subr.bf16.mxu0 0
        %1748 = vmatpush1.bf16.msra.mxu0 0
        %1749 = vmatprep.subr.bf16.mxu0 0
        %1750 = vmatpush1.bf16.msra.mxu0 0
        %1751 = vmatprep.subr.bf16.mxu0 0
        %1752 = vmatpush1.bf16.msra.mxu0 0
        %1753 = vmatprep.subr.bf16.mxu0 0
        %1754 = vmatpush1.bf16.msra.mxu0 0
        %1755 = vmatprep.subr.bf16.mxu0 0
        %1756 = vmatpush1.bf16.msra.mxu0 0
        %1757 = vmatprep.subr.bf16.mxu0 0
        %1758 = vmatpush1.bf16.msra.mxu0 0
        %1759 = vmatprep.subr.bf16.mxu0 0
        %1760 = vmatpush1.bf16.msra.mxu0 0
        %1761 = vmatprep.subr.bf16.mxu0 0
        %1762 = vmatpush1.bf16.msra.mxu0 0
        %1763 = vmatprep.mubr.bf16.mxu0 0
        %1764 = vmatmul.mubr.bf16.gmra.mrb[0].mxu0 %v1720
        %v1765 = vpop.f32.mrb[0].mxu0
        %v1766 = vadd.f32 0.0, %v1765
        %v1767 = vpop.f32.mrb[0].mxu0
        %v1768 = vpop.f32.mrb[0].mxu0
        %v1769 = vadd.f32 0.0, %v1768
        %v1770 = vpop.f32.mrb[0].mxu0
        %1771 = vmatprep.mubr.bf16.mxu0 0
        %1772 = vmatmul.mubr.bf16.gmra.mrb[0].mxu0 %v1723
        %v1773 = vpop.f32.mrb[0].mxu0
        %v1774 = vadd.f32 0.0, %v1773
        %v1775 = vpop.f32.mrb[0].mxu0
        %v1776 = vpop.f32.mrb[0].mxu0
        %v1777 = vadd.f32 0.0, %v1776
        %v1778 = vpop.f32.mrb[0].mxu0
        %1779 = vmatprep.mubr.bf16.mxu0 0
        %1780 = vmatmul.mubr.bf16.gmra.mrb[0].mxu0 %v1726
        %v1781 = vpop.f32.mrb[0].mxu0
        %v1782 = vadd.f32 0.0, %v1781
        %v1783 = vpop.f32.mrb[0].mxu0
        %v1784 = vpop.f32.mrb[0].mxu0
        %v1785 = vadd.f32 0.0, %v1784
        %v1786 = vpop.f32.mrb[0].mxu0
        %1787 = vmatprep.mubr.bf16.mxu0 0
        %1788 = vmatmul.mubr.bf16.gmra.mrb[0].mxu0 %v1729
        %v1789 = vpop.f32.mrb[0].mxu0
        %v1790 = vadd.f32 0.0, %v1789
        %v1791 = vpop.f32.mrb[0].mxu0
        %v1792 = vpop.f32.mrb[0].mxu0
        %v1793 = vadd.f32 0.0, %v1792
        %v1794 = vpop.f32.mrb[0].mxu0
        %1795 = vdwg.mxu0
        %v1796 = vadd.f32 %v1539, %v1766
        %v1797 = vadd.f32 %v1540, %v1769
        %v1798 = vadd.f32 %v1541, %v1774
        %v1799 = vadd.f32 %v1542, %v1777
        %v1800 = vadd.f32 %v1543, %v1782
        %v1801 = vadd.f32 %v1544, %v1785
        %v1802 = vadd.f32 %v1545, %v1790
        %v1803 = vadd.f32 %v1546, %v1793
        %v1804 = vld [vmem:[%s2] sm:$0x1]
        %v1806 = vlaneseq
        %v1807 = vshrl.u32 %v1806, 7
        %v1808 = vsub.s32 0, %v1807
        %v1809 = vrot.slane %v1804, %v1808
        %v1811 = vadd.f32 %v1796, %v1809
        %v1812 = vadd.f32 %v1797, %v1809
        %v1813 = vadd.f32 %v1798, %v1809
        %v1814 = vadd.f32 %v1799, %v1809
        %v1815 = vadd.f32 %v1800, %v1809
        %v1816 = vadd.f32 %v1801, %v1809
        %v1817 = vadd.f32 %v1802, %v1809
        %v1818 = vadd.f32 %v1803, %v1809
        %1819 = vst [vmem:[%s163] sm:$0xff] %v1811
        %1820 = vst [vmem:[%s163 + $0x8] sm:$0xff] %v1812
        %1821 = vst [vmem:[%s163 + $0x10] sm:$0xff] %v1813
        %1822 = vst [vmem:[%s163 + $0x18] sm:$0xff] %v1814
        %1823 = vst [vmem:[%s163 + $0x20] sm:$0xff] %v1815
        %1824 = vst [vmem:[%s163 + $0x28] sm:$0xff] %v1816
        %1825 = vst [vmem:[%s163 + $0x30] sm:$0xff] %v1817
        %1826 = vst [vmem:[%s163 + $0x38] sm:$0xff] %v1818
        %s1827 = sand.u32 %s93, 1
        %s1828 = scalar_lea.sflag [#allocation3], %s1827
        %s1829 = sand.u32 %s93, 1
        %s1830 = smul.addr %s1829, 64
        %s1831 = scalar_lea.vmem [#allocation2], %s1830
        // Predicated region
        $region33: #{tpu_custom_call.1} parent=31 // pred_check
          %p1832 = pneg %p103
        $region34: #{tpu_custom_call.1} parent=31 // pred_check_branch
          %1834 = sbr.rel (%p1832) target = $region36
        $region35: #{tpu_custom_call.1} parent=31 // pred_region
          %s1836 = ssub.s32 1024, 1024
          %1837 = vsyncadd %s1828, %s1836
          %s1838 = smul.addr %s17, 8
          %s1839 = smul.addr %s1838, 128
          %s1840 = scalar_lea.hbm %s3, %s1839
          %s1841 = sshll.u32 %s1831, 4
          %s1842 = int_to_ptr.vmem [resolvable:$true] %s1841
          %1847 = dma.vmem_to_hbm [thread:$0]  %s1842, 1024, %s1840, %s1828, 128, 128, 8
        $region36: #{tpu_custom_call.1} parent=31 // pred_fallthru
          _
      $region32: #{tpu_custom_call.1} parent=5 // pred_fallthru
        _
      %p1848 = scmp.le.s32.totalorder 2, %s12
      // Predicated region
      $region37: #{tpu_custom_call.1} parent=5 // pred_check
        %p1849 = pneg %p1848
      $region38: #{tpu_custom_call.1} parent=5 // pred_check_branch
        %1851 = sbr.rel (%p1849) target = $region40
      $region39: #{tpu_custom_call.1} parent=5 // pred_region
        %s1852 = ssub.s32 %s12, 2
        // Predicated region
        $region41: #{tpu_custom_call.1} parent=39 // pred_check
          %p1853 = pneg %p109
        $region42: #{tpu_custom_call.1} parent=39 // pred_check_branch
          %1855 = sbr.rel (%p1853) target = $region44
        $region43: #{tpu_custom_call.1} parent=39 // pred_region
          %s1856 = sand.u32 %s94, 1
          %s1857 = scalar_lea.sflag [#allocation3], %s1856
          %s1858 = sand.u32 %s94, 1
          %s1859 = smul.addr %s1858, 64
          %s1860 = scalar_lea.vmem [#allocation2], %s1859
          %1861 = dma.done %s1857, 1024
        $region44: #{tpu_custom_call.1} parent=39 // pred_fallthru
          _
      $region40: #{tpu_custom_call.1} parent=5 // pred_fallthru
        _
    $region6: #{tpu_custom_call.1} parent=1 // loop_footer
      %s16 = sadd.s32 1, %s12
    $region7: #{tpu_custom_call.1} parent=1 // loop_footer_branch
      %11 = sbr.rel target = $region3
    $region8: #{tpu_custom_call.1} parent=1 // loop_exit
      _
    %1862 = vsyncpa [#allocation3], 1
    %s1863 = scalar_lea.sflag [#allocation3], 1
    %1864 = vsyncpa %s1863, 1

</llo_original>
